<compile_context>
chip_gen: v7x
topology: tpu7x:2x2x1
jax: 0.10.0
libtpu: 0.0.40
codegen_flags: <defaults>
</compile_context>

<pallas_src>
import math

import jax
import jax.numpy as jnp
import numpy as np
from jax.experimental import pallas as pl
from jax.experimental.pallas import tpu as pltpu

# ------------------------- problem sizes (small) -----------------------------
B, S, H = 2, 8, 32          # batch, sequence, hidden_size
FFN = 64                    # ffn_size
NH = 4                      # head_size (number of heads)
DK = H // NH                # att_size
SCALE = DK ** (-0.5)
EPS = 1e-5                  # nn.LayerNorm default eps

BS = B * S                  # batch folded into rows
H3 = 3 * H                  # fused QKV width (96)
VROWS, VCOLS = 8, H3        # packed bias / LayerNorm slab (8, 96)


# ------------------------------ in-kernel math --------------------------------
def _erf(x):
    # Abramowitz & Stegun 7.1.26 rational approximation (|err| < 1.5e-7),
    # matching nn.GELU()'s exact erf semantics in float32.
    a1, a2, a3, a4, a5 = 0.254829592, -0.284496736, 1.421413741, -1.453152027, 1.061405429
    p = 0.3275911
    sgn = jnp.where(x >= 0.0, 1.0, -1.0)
    ax = jnp.abs(x)
    t = 1.0 / (1.0 + p * ax)
    poly = ((((a5 * t + a4) * t + a3) * t + a2) * t + a1) * t
    return sgn * (1.0 - poly * jnp.exp(-ax * ax))


def _gelu_exact(x):
    return 0.5 * x * (1.0 + _erf(x * (1.0 / math.sqrt(2.0))))


def _layernorm(v, g, b):
    mu = jnp.mean(v, axis=-1, keepdims=True)
    var = jnp.mean((v - mu) ** 2, axis=-1, keepdims=True)
    return (v - mu) * jax.lax.rsqrt(var + EPS) * g + b


# --------------------------------- kernel -------------------------------------
def encoder_layer_kernel(x_ref, bias_ref, wqkv_ref, wo_ref, w1_ref, w2_ref,
                         vecs_ref, o_ref, attn_buf):
    # x_ref: (B*S, H) — all batches processed in one shot (grid = (1,)).
    x = x_ref[...]                                            # (BS, H)

    # Unpack the (8, 96) bias / LayerNorm slab (rows padded with zeros).
    ln1_g = vecs_ref[0:1, 0:H]
    ln1_b = vecs_ref[1:2, 0:H]
    bqkv  = vecs_ref[2:3, 0:H3]        # plain concat of bq | bk | bv (no scale fold)
    bo    = vecs_ref[3:4, 0:H]
    ln2_g = vecs_ref[4:5, 0:H]
    ln2_b = vecs_ref[5:6, 0:H]
    b1    = vecs_ref[6:7, 0:FFN]
    b2    = vecs_ref[7:8, 0:H]

    # ---- self-attention block: y = LN(x); y = MHA(y,y,y,bias); x = x + y ----
    y = _layernorm(x, ln1_g, ln1_b)                           # (BS, H)
    # Single fused QKV projection (one MXU push instead of three).
    qkv = jnp.dot(y, wqkv_ref[...], preferred_element_type=jnp.float32) + bqkv  # (BS, 3H)

    # Tiny per-(batch, head) attention; results written lane-contiguously into a
    # (BS, H) VMEM slab so the output projection is ONE matmul.
    for b in range(B):
        r0 = b * S
        for h in range(NH):
            c0 = h * DK
            # Scale q AFTER the projection (incl. bias), exactly like the reference.
            qh = qkv[r0:r0 + S, c0:c0 + DK] * SCALE           # (S, DK)
            kh = qkv[r0:r0 + S, H + c0:H + c0 + DK]           # (S, DK)
            vh = qkv[r0:r0 + S, 2 * H + c0:2 * H + c0 + DK]   # (S, DK)
            # scores = qh @ kh.T  (contract on DK without explicit transpose)
            scores = jax.lax.dot_general(
                qh, kh, (((1,), (1,)), ((), ())),
                preferred_element_type=jnp.float32)           # (S, S)
            scores = scores + bias_ref[b, h]                  # attn_bias[b, h]
            m = jnp.max(scores, axis=-1, keepdims=True)
            e = jnp.exp(scores - m)
            p = e / jnp.sum(e, axis=-1, keepdims=True)        # exact softmax
            attn_buf[r0:r0 + S, c0:c0 + DK] = jnp.dot(
                p, vh, preferred_element_type=jnp.float32)    # (S, DK)

    # Single fused output projection over all batches / heads.
    attn = jnp.dot(attn_buf[...], wo_ref[...],
                   preferred_element_type=jnp.float32) + bo   # (BS, H)
    x = x + attn

    # ---- FFN block: y = LN(x); y = W2(gelu(W1 y)); x = x + y ----
    y = _layernorm(x, ln2_g, ln2_b)
    hdn = jnp.dot(y, w1_ref[...], preferred_element_type=jnp.float32) + b1
    hdn = _gelu_exact(hdn)
    out = jnp.dot(hdn, w2_ref[...], preferred_element_type=jnp.float32) + b2

    o_ref[...] = (x + out).astype(o_ref.dtype)


# --------------------------------- wrapper ------------------------------------
def encoder_layer(x, attn_bias, P):
    """x: (B,S,H) f32, attn_bias: (B,NH,S,S) f32, P: dict of PyTorch-shaped params."""
    # Fused QKV weight (in, 3*out).  NOTE: no SCALE folding — it is applied to q
    # inside the kernel after the projection, matching the reference factorization.
    wqkv = jnp.concatenate(
        [P["wq"].T, P["wk"].T, P["wv"].T], axis=1).astype(jnp.float32)           # (H, 3H)
    bqkv = jnp.concatenate([P["bq"], P["bk"], P["bv"]], axis=0)                   # (3H,)

    # Pack all bias / LayerNorm vectors into one (8, 96) slab (rows zero-padded).
    def _row(v):
        return jnp.zeros((VCOLS,), jnp.float32).at[:v.shape[0]].set(v)

    vecs = jnp.stack([
        _row(P["ln1_g"]), _row(P["ln1_b"]), _row(bqkv), _row(P["bo"]),
        _row(P["ln2_g"]), _row(P["ln2_b"]), _row(P["b1"]), _row(P["b2"]),
    ], axis=0)                                                                    # (8, 96)

    wo = P["wo"].T            # (H, H)
    w1 = P["w1"].T            # (H, FFN)
    w2 = P["w2"].T            # (FFN, H)

    x2d = x.reshape(BS, H)    # fold batch into rows

    inputs = [x2d, attn_bias, wqkv, wo, w1, w2, vecs]
    in_specs = [pl.BlockSpec(a.shape, lambda i, nd=a.ndim: (0,) * nd) for a in inputs]

    out2d = pl.pallas_call(
        encoder_layer_kernel,
        out_shape=jax.ShapeDtypeStruct((BS, H), x.dtype),
        grid=(1,),
        in_specs=in_specs,
        out_specs=pl.BlockSpec((BS, H), lambda i: (0, 0)),
        scratch_shapes=[pltpu.VMEM((BS, H), jnp.float32)],
        compiler_params=pltpu.CompilerParams(
            dimension_semantics=("arbitrary",)),
    )(*inputs)
    return out2d.reshape(B, S, H)


# --------------------------- pure-JAX reference --------------------------------
def reference(x, attn_bias, P):
    def ln(v, g, b):
        mu = v.mean(-1, keepdims=True)
        var = ((v - mu) ** 2).mean(-1, keepdims=True)
        return (v - mu) / jnp.sqrt(var + EPS) * g + b

    y = ln(x, P["ln1_g"], P["ln1_b"])
    q = (y @ P["wq"].T + P["bq"]).reshape(B, S, NH, DK).transpose(0, 2, 1, 3) * SCALE
    k = (y @ P["wk"].T + P["bk"]).reshape(B, S, NH, DK).transpose(0, 2, 1, 3)
    v = (y @ P["wv"].T + P["bv"]).reshape(B, S, NH, DK).transpose(0, 2, 1, 3)
    s = jnp.einsum("bhqd,bhkd->bhqk", q, k) + attn_bias
    p = jax.nn.softmax(s, axis=-1)
    o = jnp.einsum("bhqk,bhkd->bhqd", p, v).transpose(0, 2, 1, 3).reshape(B, S, H)
    o = o @ P["wo"].T + P["bo"]
    x = x + o
    y = ln(x, P["ln2_g"], P["ln2_b"])
    hdn = y @ P["w1"].T + P["b1"]
    hdn = 0.5 * hdn * (1.0 + jax.scipy.special.erf(hdn / jnp.sqrt(2.0)))
    o = hdn @ P["w2"].T + P["b2"]
    return x + o


# ----------------------------------- main --------------------------------------
if __name__ == "__main__":
    key = jax.random.PRNGKey(0)
    keys = jax.random.split(key, 16)

    def rnd(k, shape, scale=0.1):
        return (scale * jax.random.normal(k, shape)).astype(jnp.float32)

    P = {
        "ln1_g": jnp.ones((H,), jnp.float32),
        "ln1_b": jnp.zeros((H,), jnp.float32),
        "wq": rnd(keys[0], (H, H)), "bq": rnd(keys[1], (H,)),
        "wk": rnd(keys[2], (H, H)), "bk": rnd(keys[3], (H,)),
        "wv": rnd(keys[4], (H, H)), "bv": rnd(keys[5], (H,)),
        "wo": rnd(keys[6], (H, H)), "bo": rnd(keys[7], (H,)),
        "ln2_g": jnp.ones((H,), jnp.float32),
        "ln2_b": jnp.zeros((H,), jnp.float32),
        "w1": rnd(keys[8], (FFN, H)), "b1": rnd(keys[9], (FFN,)),
        "w2": rnd(keys[10], (H, FFN)), "b2": rnd(keys[11], (H,)),
    }

    x = rnd(keys[12], (B, S, H), scale=1.0)
    attn_bias = rnd(keys[13], (B, NH, S, S), scale=1.0)

    out = jax.block_until_ready(encoder_layer(x, attn_bias, P))
    ref = jax.block_until_ready(reference(x, attn_bias, P))

    # Kernel and reference now share the exact same factorization (no scale
    # folding, exact softmax division, erf |err|<1.5e-7).  The 2e-3 margin only
    # covers the gap between Mosaic's f32 matmul path and XLA's default
    # (bf16-pass) f32 matmul used by the pure-JAX reference on TPU; in
    # interpret mode the observed error is ~1e-5.
    if not np.allclose(np.asarray(out), np.asarray(ref), atol=2e-3, rtol=2e-3):
        raise AssertionError(
            f"mismatch: max abs err = {np.max(np.abs(np.asarray(out) - np.asarray(ref)))}")
    print("KERNEL_OK")
</pallas_src>

<mosaic_0001>
module attributes {stable_mosaic.version = 11 : i64} {
  func.func @encoder_layer_kernel(%arg0: i32, %arg1: memref<16x32xf32, #tpu.memory_space<vmem>>, %arg2: memref<2x4x8x8xf32, #tpu.memory_space<vmem>>, %arg3: memref<32x96xf32, #tpu.memory_space<vmem>>, %arg4: memref<32x32xf32, #tpu.memory_space<vmem>>, %arg5: memref<32x64xf32, #tpu.memory_space<vmem>>, %arg6: memref<64x32xf32, #tpu.memory_space<vmem>>, %arg7: memref<8x96xf32, #tpu.memory_space<vmem>>, %arg8: memref<16x32xf32, #tpu.memory_space<vmem>>, %arg9: memref<16x32xf32, #tpu.memory_space<vmem>>) attributes {dimension_semantics = [#tpu.dimension_semantics<arbitrary>], iteration_bounds = array<i64: 1>, scalar_prefetch = 0 : i64, scratch_operands = 1 : i64, tpu.core_type = #tpu.core_type<tc>, window_params = [{pipeline_mode = #tpu.pipeline_mode<synchronous>, transform_indices = @transform_0, window_bounds = array<i64: 16, 32>}, {pipeline_mode = #tpu.pipeline_mode<synchronous>, transform_indices = @transform_1, window_bounds = array<i64: 2, 4, 8, 8>}, {pipeline_mode = #tpu.pipeline_mode<synchronous>, transform_indices = @transform_2, window_bounds = array<i64: 32, 96>}, {pipeline_mode = #tpu.pipeline_mode<synchronous>, transform_indices = @transform_3, window_bounds = array<i64: 32, 32>}, {pipeline_mode = #tpu.pipeline_mode<synchronous>, transform_indices = @transform_4, window_bounds = array<i64: 32, 64>}, {pipeline_mode = #tpu.pipeline_mode<synchronous>, transform_indices = @transform_5, window_bounds = array<i64: 64, 32>}, {pipeline_mode = #tpu.pipeline_mode<synchronous>, transform_indices = @transform_6, window_bounds = array<i64: 8, 96>}, {pipeline_mode = #tpu.pipeline_mode<synchronous>, transform_indices = @transform_7, window_bounds = array<i64: 16, 32>}]} {
    %c0 = arith.constant 0 : index
    %c0_0 = arith.constant 0 : index
    %0 = vector.load %arg1[%c0, %c0_0] : memref<16x32xf32, #tpu.memory_space<vmem>>, vector<16x32xf32>
    %c0_1 = arith.constant 0 : index
    %c0_2 = arith.constant 0 : index
    %1 = vector.load %arg7[%c0_1, %c0_2] : memref<8x96xf32, #tpu.memory_space<vmem>>, vector<1x32xf32>
    %c1 = arith.constant 1 : index
    %c0_3 = arith.constant 0 : index
    %2 = vector.load %arg7[%c1, %c0_3] : memref<8x96xf32, #tpu.memory_space<vmem>>, vector<1x32xf32>
    %c2 = arith.constant 2 : index
    %c0_4 = arith.constant 0 : index
    %3 = vector.load %arg7[%c2, %c0_4] : memref<8x96xf32, #tpu.memory_space<vmem>>, vector<1x96xf32>
    %c3 = arith.constant 3 : index
    %c0_5 = arith.constant 0 : index
    %4 = vector.load %arg7[%c3, %c0_5] : memref<8x96xf32, #tpu.memory_space<vmem>>, vector<1x32xf32>
    %c4 = arith.constant 4 : index
    %c0_6 = arith.constant 0 : index
    %5 = vector.load %arg7[%c4, %c0_6] : memref<8x96xf32, #tpu.memory_space<vmem>>, vector<1x32xf32>
    %c5 = arith.constant 5 : index
    %c0_7 = arith.constant 0 : index
    %6 = vector.load %arg7[%c5, %c0_7] : memref<8x96xf32, #tpu.memory_space<vmem>>, vector<1x32xf32>
    %c6 = arith.constant 6 : index
    %c0_8 = arith.constant 0 : index
    %7 = vector.load %arg7[%c6, %c0_8] : memref<8x96xf32, #tpu.memory_space<vmem>>, vector<1x64xf32>
    %c7 = arith.constant 7 : index
    %c0_9 = arith.constant 0 : index
    %8 = vector.load %arg7[%c7, %c0_9] : memref<8x96xf32, #tpu.memory_space<vmem>>, vector<1x32xf32>
    %cst = arith.constant dense<0.000000e+00> : vector<16xf32>
    %9 = vector.multi_reduction <add>, %0, %cst [1] : vector<16x32xf32> to vector<16xf32>
    %10 = vector.shape_cast %9 : vector<16xf32> to vector<16x1xf32>
    %cst_10 = arith.constant 3.200000e+01 : f32
    %11 = vector.broadcast %cst_10 : f32 to vector<16x1xf32>
    %12 = arith.divf %10, %11 : vector<16x1xf32>
    %13 = vector.broadcast %12 : vector<16x1xf32> to vector<16x32xf32>
    %14 = arith.subf %0, %13 : vector<16x32xf32>
    %15 = arith.mulf %14, %14 : vector<16x32xf32>
    %cst_11 = arith.constant dense<0.000000e+00> : vector<16xf32>
    %16 = vector.multi_reduction <add>, %15, %cst_11 [1] : vector<16x32xf32> to vector<16xf32>
    %17 = vector.shape_cast %16 : vector<16xf32> to vector<16x1xf32>
    %cst_12 = arith.constant 3.200000e+01 : f32
    %18 = vector.broadcast %cst_12 : f32 to vector<16x1xf32>
    %19 = arith.divf %17, %18 : vector<16x1xf32>
    %20 = vector.broadcast %12 : vector<16x1xf32> to vector<16x32xf32>
    %21 = arith.subf %0, %20 : vector<16x32xf32>
    %cst_13 = arith.constant 9.99999974E-6 : f32
    %22 = vector.broadcast %cst_13 : f32 to vector<16x1xf32>
    %23 = arith.addf %19, %22 : vector<16x1xf32>
    %24 = math.rsqrt %23 : vector<16x1xf32>
    %25 = vector.broadcast %24 : vector<16x1xf32> to vector<16x32xf32>
    %26 = arith.mulf %21, %25 : vector<16x32xf32>
    %27 = vector.broadcast %1 : vector<1x32xf32> to vector<16x32xf32>
    %28 = arith.mulf %26, %27 : vector<16x32xf32>
    %29 = vector.broadcast %2 : vector<1x32xf32> to vector<16x32xf32>
    %30 = arith.addf %28, %29 : vector<16x32xf32>
    %c0_14 = arith.constant 0 : index
    %c0_15 = arith.constant 0 : index
    %31 = vector.load %arg3[%c0_14, %c0_15] : memref<32x96xf32, #tpu.memory_space<vmem>>, vector<32x96xf32>
    %cst_16 = arith.constant dense<0.000000e+00> : vector<16x96xf32>
    %32 = tpu.matmul %30, %31, %cst_16 {dimension_numbers = #tpu.dot_dimension_numbers<[1], [0], [0], [1], [0, 0, 1, 1], [], []>} : vector<16x32xf32>, vector<32x96xf32>, vector<16x96xf32> -> vector<16x96xf32>
    %33 = vector.broadcast %3 : vector<1x96xf32> to vector<16x96xf32>
    %34 = arith.addf %32, %33 : vector<16x96xf32>
    %35 = vector.extract_strided_slice %34 {offsets = [0, 0], sizes = [8, 8], strides = [1, 1]} : vector<16x96xf32> to vector<8x8xf32>
    %cst_17 = arith.constant 0.353553385 : f32
    %36 = vector.broadcast %cst_17 : f32 to vector<8x8xf32>
    %37 = arith.mulf %35, %36 : vector<8x8xf32>
    %38 = vector.extract_strided_slice %34 {offsets = [0, 32], sizes = [8, 8], strides = [1, 1]} : vector<16x96xf32> to vector<8x8xf32>
    %39 = vector.extract_strided_slice %34 {offsets = [0, 64], sizes = [8, 8], strides = [1, 1]} : vector<16x96xf32> to vector<8x8xf32>
    %cst_18 = arith.constant dense<0.000000e+00> : vector<8x8xf32>
    %40 = tpu.matmul %37, %38, %cst_18 {dimension_numbers = #tpu.dot_dimension_numbers<[1], [1], [0], [0], [0, 0, 1, 0], [], []>} : vector<8x8xf32>, vector<8x8xf32>, vector<8x8xf32> -> vector<8x8xf32>
    %c0_19 = arith.constant 0 : index
    %c0_20 = arith.constant 0 : index
    %c0_21 = arith.constant 0 : index
    %c0_22 = arith.constant 0 : index
    %41 = vector.load %arg2[%c0_19, %c0_20, %c0_21, %c0_22] : memref<2x4x8x8xf32, #tpu.memory_space<vmem>>, vector<1x1x8x8xf32>
    %42 = vector.shape_cast %41 : vector<1x1x8x8xf32> to vector<8x8xf32>
    %43 = arith.addf %40, %42 : vector<8x8xf32>
    %cst_23 = arith.constant dense<0xFF800000> : vector<8xf32>
    %44 = vector.multi_reduction <maximumf>, %43, %cst_23 [1] : vector<8x8xf32> to vector<8xf32>
    %45 = vector.shape_cast %44 : vector<8xf32> to vector<8x1xf32>
    %46 = vector.broadcast %45 : vector<8x1xf32> to vector<8x8xf32>
    %47 = arith.subf %43, %46 : vector<8x8xf32>
    %48 = math.exp %47 : vector<8x8xf32>
    %cst_24 = arith.constant dense<0.000000e+00> : vector<8xf32>
    %49 = vector.multi_reduction <add>, %48, %cst_24 [1] : vector<8x8xf32> to vector<8xf32>
    %50 = vector.shape_cast %49 : vector<8xf32> to vector<8x1xf32>
    %51 = vector.broadcast %50 : vector<8x1xf32> to vector<8x8xf32>
    %52 = arith.divf %48, %51 : vector<8x8xf32>
    %cst_25 = arith.constant dense<0.000000e+00> : vector<8x8xf32>
    %53 = tpu.matmul %52, %39, %cst_25 {dimension_numbers = #tpu.dot_dimension_numbers<[1], [0], [0], [1], [0, 0, 1, 1], [], []>} : vector<8x8xf32>, vector<8x8xf32>, vector<8x8xf32> -> vector<8x8xf32>
    %c0_26 = arith.constant 0 : index
    %c0_27 = arith.constant 0 : index
    %54 = vector.load %arg9[%c0_26, %c0_27] : memref<16x32xf32, #tpu.memory_space<vmem>>, vector<8x8xf32>
    tpu.vector_store %arg9[%c0_26, %c0_27], %53 {strides = array<i32>} : memref<16x32xf32, #tpu.memory_space<vmem>>, vector<8x8xf32>,
    %55 = vector.extract_strided_slice %34 {offsets = [0, 8], sizes = [8, 8], strides = [1, 1]} : vector<16x96xf32> to vector<8x8xf32>
    %cst_28 = arith.constant 0.353553385 : f32
    %56 = vector.broadcast %cst_28 : f32 to vector<8x8xf32>
    %57 = arith.mulf %55, %56 : vector<8x8xf32>
    %58 = vector.extract_strided_slice %34 {offsets = [0, 40], sizes = [8, 8], strides = [1, 1]} : vector<16x96xf32> to vector<8x8xf32>
    %59 = vector.extract_strided_slice %34 {offsets = [0, 72], sizes = [8, 8], strides = [1, 1]} : vector<16x96xf32> to vector<8x8xf32>
    %cst_29 = arith.constant dense<0.000000e+00> : vector<8x8xf32>
    %60 = tpu.matmul %57, %58, %cst_29 {dimension_numbers = #tpu.dot_dimension_numbers<[1], [1], [0], [0], [0, 0, 1, 0], [], []>} : vector<8x8xf32>, vector<8x8xf32>, vector<8x8xf32> -> vector<8x8xf32>
    %c0_30 = arith.constant 0 : index
    %c1_31 = arith.constant 1 : index
    %c0_32 = arith.constant 0 : index
    %c0_33 = arith.constant 0 : index
    %61 = vector.load %arg2[%c0_30, %c1_31, %c0_32, %c0_33] : memref<2x4x8x8xf32, #tpu.memory_space<vmem>>, vector<1x1x8x8xf32>
    %62 = vector.shape_cast %61 : vector<1x1x8x8xf32> to vector<8x8xf32>
    %63 = arith.addf %60, %62 : vector<8x8xf32>
    %cst_34 = arith.constant dense<0xFF800000> : vector<8xf32>
    %64 = vector.multi_reduction <maximumf>, %63, %cst_34 [1] : vector<8x8xf32> to vector<8xf32>
    %65 = vector.shape_cast %64 : vector<8xf32> to vector<8x1xf32>
    %66 = vector.broadcast %65 : vector<8x1xf32> to vector<8x8xf32>
    %67 = arith.subf %63, %66 : vector<8x8xf32>
    %68 = math.exp %67 : vector<8x8xf32>
    %cst_35 = arith.constant dense<0.000000e+00> : vector<8xf32>
    %69 = vector.multi_reduction <add>, %68, %cst_35 [1] : vector<8x8xf32> to vector<8xf32>
    %70 = vector.shape_cast %69 : vector<8xf32> to vector<8x1xf32>
    %71 = vector.broadcast %70 : vector<8x1xf32> to vector<8x8xf32>
    %72 = arith.divf %68, %71 : vector<8x8xf32>
    %cst_36 = arith.constant dense<0.000000e+00> : vector<8x8xf32>
    %73 = tpu.matmul %72, %59, %cst_36 {dimension_numbers = #tpu.dot_dimension_numbers<[1], [0], [0], [1], [0, 0, 1, 1], [], []>} : vector<8x8xf32>, vector<8x8xf32>, vector<8x8xf32> -> vector<8x8xf32>
    %c0_37 = arith.constant 0 : index
    %c8 = arith.constant 8 : index
    %74 = vector.load %arg9[%c0_37, %c8] : memref<16x32xf32, #tpu.memory_space<vmem>>, vector<8x8xf32>
    tpu.vector_store %arg9[%c0_37, %c8], %73 {strides = array<i32>} : memref<16x32xf32, #tpu.memory_space<vmem>>, vector<8x8xf32>,
    %75 = vector.extract_strided_slice %34 {offsets = [0, 16], sizes = [8, 8], strides = [1, 1]} : vector<16x96xf32> to vector<8x8xf32>
    %cst_38 = arith.constant 0.353553385 : f32
    %76 = vector.broadcast %cst_38 : f32 to vector<8x8xf32>
    %77 = arith.mulf %75, %76 : vector<8x8xf32>
    %78 = vector.extract_strided_slice %34 {offsets = [0, 48], sizes = [8, 8], strides = [1, 1]} : vector<16x96xf32> to vector<8x8xf32>
    %79 = vector.extract_strided_slice %34 {offsets = [0, 80], sizes = [8, 8], strides = [1, 1]} : vector<16x96xf32> to vector<8x8xf32>
    %cst_39 = arith.constant dense<0.000000e+00> : vector<8x8xf32>
    %80 = tpu.matmul %77, %78, %cst_39 {dimension_numbers = #tpu.dot_dimension_numbers<[1], [1], [0], [0], [0, 0, 1, 0], [], []>} : vector<8x8xf32>, vector<8x8xf32>, vector<8x8xf32> -> vector<8x8xf32>
    %c0_40 = arith.constant 0 : index
    %c2_41 = arith.constant 2 : index
    %c0_42 = arith.constant 0 : index
    %c0_43 = arith.constant 0 : index
    %81 = vector.load %arg2[%c0_40, %c2_41, %c0_42, %c0_43] : memref<2x4x8x8xf32, #tpu.memory_space<vmem>>, vector<1x1x8x8xf32>
    %82 = vector.shape_cast %81 : vector<1x1x8x8xf32> to vector<8x8xf32>
    %83 = arith.addf %80, %82 : vector<8x8xf32>
    %cst_44 = arith.constant dense<0xFF800000> : vector<8xf32>
    %84 = vector.multi_reduction <maximumf>, %83, %cst_44 [1] : vector<8x8xf32> to vector<8xf32>
    %85 = vector.shape_cast %84 : vector<8xf32> to vector<8x1xf32>
    %86 = vector.broadcast %85 : vector<8x1xf32> to vector<8x8xf32>
    %87 = arith.subf %83, %86 : vector<8x8xf32>
    %88 = math.exp %87 : vector<8x8xf32>
    %cst_45 = arith.constant dense<0.000000e+00> : vector<8xf32>
    %89 = vector.multi_reduction <add>, %88, %cst_45 [1] : vector<8x8xf32> to vector<8xf32>
    %90 = vector.shape_cast %89 : vector<8xf32> to vector<8x1xf32>
    %91 = vector.broadcast %90 : vector<8x1xf32> to vector<8x8xf32>
    %92 = arith.divf %88, %91 : vector<8x8xf32>
    %cst_46 = arith.constant dense<0.000000e+00> : vector<8x8xf32>
    %93 = tpu.matmul %92, %79, %cst_46 {dimension_numbers = #tpu.dot_dimension_numbers<[1], [0], [0], [1], [0, 0, 1, 1], [], []>} : vector<8x8xf32>, vector<8x8xf32>, vector<8x8xf32> -> vector<8x8xf32>
    %c0_47 = arith.constant 0 : index
    %c16 = arith.constant 16 : index
    %94 = vector.load %arg9[%c0_47, %c16] : memref<16x32xf32, #tpu.memory_space<vmem>>, vector<8x8xf32>
    tpu.vector_store %arg9[%c0_47, %c16], %93 {strides = array<i32>} : memref<16x32xf32, #tpu.memory_space<vmem>>, vector<8x8xf32>,
    %95 = vector.extract_strided_slice %34 {offsets = [0, 24], sizes = [8, 8], strides = [1, 1]} : vector<16x96xf32> to vector<8x8xf32>
    %cst_48 = arith.constant 0.353553385 : f32
    %96 = vector.broadcast %cst_48 : f32 to vector<8x8xf32>
    %97 = arith.mulf %95, %96 : vector<8x8xf32>
    %98 = vector.extract_strided_slice %34 {offsets = [0, 56], sizes = [8, 8], strides = [1, 1]} : vector<16x96xf32> to vector<8x8xf32>
    %99 = vector.extract_strided_slice %34 {offsets = [0, 88], sizes = [8, 8], strides = [1, 1]} : vector<16x96xf32> to vector<8x8xf32>
    %cst_49 = arith.constant dense<0.000000e+00> : vector<8x8xf32>
    %100 = tpu.matmul %97, %98, %cst_49 {dimension_numbers = #tpu.dot_dimension_numbers<[1], [1], [0], [0], [0, 0, 1, 0], [], []>} : vector<8x8xf32>, vector<8x8xf32>, vector<8x8xf32> -> vector<8x8xf32>
    %c0_50 = arith.constant 0 : index
    %c3_51 = arith.constant 3 : index
    %c0_52 = arith.constant 0 : index
    %c0_53 = arith.constant 0 : index
    %101 = vector.load %arg2[%c0_50, %c3_51, %c0_52, %c0_53] : memref<2x4x8x8xf32, #tpu.memory_space<vmem>>, vector<1x1x8x8xf32>
    %102 = vector.shape_cast %101 : vector<1x1x8x8xf32> to vector<8x8xf32>
    %103 = arith.addf %100, %102 : vector<8x8xf32>
    %cst_54 = arith.constant dense<0xFF800000> : vector<8xf32>
    %104 = vector.multi_reduction <maximumf>, %103, %cst_54 [1] : vector<8x8xf32> to vector<8xf32>
    %105 = vector.shape_cast %104 : vector<8xf32> to vector<8x1xf32>
    %106 = vector.broadcast %105 : vector<8x1xf32> to vector<8x8xf32>
    %107 = arith.subf %103, %106 : vector<8x8xf32>
    %108 = math.exp %107 : vector<8x8xf32>
    %cst_55 = arith.constant dense<0.000000e+00> : vector<8xf32>
    %109 = vector.multi_reduction <add>, %108, %cst_55 [1] : vector<8x8xf32> to vector<8xf32>
    %110 = vector.shape_cast %109 : vector<8xf32> to vector<8x1xf32>
    %111 = vector.broadcast %110 : vector<8x1xf32> to vector<8x8xf32>
    %112 = arith.divf %108, %111 : vector<8x8xf32>
    %cst_56 = arith.constant dense<0.000000e+00> : vector<8x8xf32>
    %113 = tpu.matmul %112, %99, %cst_56 {dimension_numbers = #tpu.dot_dimension_numbers<[1], [0], [0], [1], [0, 0, 1, 1], [], []>} : vector<8x8xf32>, vector<8x8xf32>, vector<8x8xf32> -> vector<8x8xf32>
    %c0_57 = arith.constant 0 : index
    %c24 = arith.constant 24 : index
    %114 = vector.load %arg9[%c0_57, %c24] : memref<16x32xf32, #tpu.memory_space<vmem>>, vector<8x8xf32>
    tpu.vector_store %arg9[%c0_57, %c24], %113 {strides = array<i32>} : memref<16x32xf32, #tpu.memory_space<vmem>>, vector<8x8xf32>,
    %115 = vector.extract_strided_slice %34 {offsets = [8, 0], sizes = [8, 8], strides = [1, 1]} : vector<16x96xf32> to vector<8x8xf32>
    %cst_58 = arith.constant 0.353553385 : f32
    %116 = vector.broadcast %cst_58 : f32 to vector<8x8xf32>
    %117 = arith.mulf %115, %116 : vector<8x8xf32>
    %118 = vector.extract_strided_slice %34 {offsets = [8, 32], sizes = [8, 8], strides = [1, 1]} : vector<16x96xf32> to vector<8x8xf32>
    %119 = vector.extract_strided_slice %34 {offsets = [8, 64], sizes = [8, 8], strides = [1, 1]} : vector<16x96xf32> to vector<8x8xf32>
    %cst_59 = arith.constant dense<0.000000e+00> : vector<8x8xf32>
    %120 = tpu.matmul %117, %118, %cst_59 {dimension_numbers = #tpu.dot_dimension_numbers<[1], [1], [0], [0], [0, 0, 1, 0], [], []>} : vector<8x8xf32>, vector<8x8xf32>, vector<8x8xf32> -> vector<8x8xf32>
    %c1_60 = arith.constant 1 : index
    %c0_61 = arith.constant 0 : index
    %c0_62 = arith.constant 0 : index
    %c0_63 = arith.constant 0 : index
    %121 = vector.load %arg2[%c1_60, %c0_61, %c0_62, %c0_63] : memref<2x4x8x8xf32, #tpu.memory_space<vmem>>, vector<1x1x8x8xf32>
    %122 = vector.shape_cast %121 : vector<1x1x8x8xf32> to vector<8x8xf32>
    %123 = arith.addf %120, %122 : vector<8x8xf32>
    %cst_64 = arith.constant dense<0xFF800000> : vector<8xf32>
    %124 = vector.multi_reduction <maximumf>, %123, %cst_64 [1] : vector<8x8xf32> to vector<8xf32>
    %125 = vector.shape_cast %124 : vector<8xf32> to vector<8x1xf32>
    %126 = vector.broadcast %125 : vector<8x1xf32> to vector<8x8xf32>
    %127 = arith.subf %123, %126 : vector<8x8xf32>
    %128 = math.exp %127 : vector<8x8xf32>
    %cst_65 = arith.constant dense<0.000000e+00> : vector<8xf32>
    %129 = vector.multi_reduction <add>, %128, %cst_65 [1] : vector<8x8xf32> to vector<8xf32>
    %130 = vector.shape_cast %129 : vector<8xf32> to vector<8x1xf32>
    %131 = vector.broadcast %130 : vector<8x1xf32> to vector<8x8xf32>
    %132 = arith.divf %128, %131 : vector<8x8xf32>
    %cst_66 = arith.constant dense<0.000000e+00> : vector<8x8xf32>
    %133 = tpu.matmul %132, %119, %cst_66 {dimension_numbers = #tpu.dot_dimension_numbers<[1], [0], [0], [1], [0, 0, 1, 1], [], []>} : vector<8x8xf32>, vector<8x8xf32>, vector<8x8xf32> -> vector<8x8xf32>
    %c8_67 = arith.constant 8 : index
    %c0_68 = arith.constant 0 : index
    %134 = vector.load %arg9[%c8_67, %c0_68] : memref<16x32xf32, #tpu.memory_space<vmem>>, vector<8x8xf32>
    tpu.vector_store %arg9[%c8_67, %c0_68], %133 {strides = array<i32>} : memref<16x32xf32, #tpu.memory_space<vmem>>, vector<8x8xf32>,
    %135 = vector.extract_strided_slice %34 {offsets = [8, 8], sizes = [8, 8], strides = [1, 1]} : vector<16x96xf32> to vector<8x8xf32>
    %cst_69 = arith.constant 0.353553385 : f32
    %136 = vector.broadcast %cst_69 : f32 to vector<8x8xf32>
    %137 = arith.mulf %135, %136 : vector<8x8xf32>
    %138 = vector.extract_strided_slice %34 {offsets = [8, 40], sizes = [8, 8], strides = [1, 1]} : vector<16x96xf32> to vector<8x8xf32>
    %139 = vector.extract_strided_slice %34 {offsets = [8, 72], sizes = [8, 8], strides = [1, 1]} : vector<16x96xf32> to vector<8x8xf32>
    %cst_70 = arith.constant dense<0.000000e+00> : vector<8x8xf32>
    %140 = tpu.matmul %137, %138, %cst_70 {dimension_numbers = #tpu.dot_dimension_numbers<[1], [1], [0], [0], [0, 0, 1, 0], [], []>} : vector<8x8xf32>, vector<8x8xf32>, vector<8x8xf32> -> vector<8x8xf32>
    %c1_71 = arith.constant 1 : index
    %c1_72 = arith.constant 1 : index
    %c0_73 = arith.constant 0 : index
    %c0_74 = arith.constant 0 : index
    %141 = vector.load %arg2[%c1_71, %c1_72, %c0_73, %c0_74] : memref<2x4x8x8xf32, #tpu.memory_space<vmem>>, vector<1x1x8x8xf32>
    %142 = vector.shape_cast %141 : vector<1x1x8x8xf32> to vector<8x8xf32>
    %143 = arith.addf %140, %142 : vector<8x8xf32>
    %cst_75 = arith.constant dense<0xFF800000> : vector<8xf32>
    %144 = vector.multi_reduction <maximumf>, %143, %cst_75 [1] : vector<8x8xf32> to vector<8xf32>
    %145 = vector.shape_cast %144 : vector<8xf32> to vector<8x1xf32>
    %146 = vector.broadcast %145 : vector<8x1xf32> to vector<8x8xf32>
    %147 = arith.subf %143, %146 : vector<8x8xf32>
    %148 = math.exp %147 : vector<8x8xf32>
    %cst_76 = arith.constant dense<0.000000e+00> : vector<8xf32>
    %149 = vector.multi_reduction <add>, %148, %cst_76 [1] : vector<8x8xf32> to vector<8xf32>
    %150 = vector.shape_cast %149 : vector<8xf32> to vector<8x1xf32>
    %151 = vector.broadcast %150 : vector<8x1xf32> to vector<8x8xf32>
    %152 = arith.divf %148, %151 : vector<8x8xf32>
    %cst_77 = arith.constant dense<0.000000e+00> : vector<8x8xf32>
    %153 = tpu.matmul %152, %139, %cst_77 {dimension_numbers = #tpu.dot_dimension_numbers<[1], [0], [0], [1], [0, 0, 1, 1], [], []>} : vector<8x8xf32>, vector<8x8xf32>, vector<8x8xf32> -> vector<8x8xf32>
    %c8_78 = arith.constant 8 : index
    %c8_79 = arith.constant 8 : index
    %154 = vector.load %arg9[%c8_78, %c8_79] : memref<16x32xf32, #tpu.memory_space<vmem>>, vector<8x8xf32>
    tpu.vector_store %arg9[%c8_78, %c8_79], %153 {strides = array<i32>} : memref<16x32xf32, #tpu.memory_space<vmem>>, vector<8x8xf32>,
    %155 = vector.extract_strided_slice %34 {offsets = [8, 16], sizes = [8, 8], strides = [1, 1]} : vector<16x96xf32> to vector<8x8xf32>
    %cst_80 = arith.constant 0.353553385 : f32
    %156 = vector.broadcast %cst_80 : f32 to vector<8x8xf32>
    %157 = arith.mulf %155, %156 : vector<8x8xf32>
    %158 = vector.extract_strided_slice %34 {offsets = [8, 48], sizes = [8, 8], strides = [1, 1]} : vector<16x96xf32> to vector<8x8xf32>
    %159 = vector.extract_strided_slice %34 {offsets = [8, 80], sizes = [8, 8], strides = [1, 1]} : vector<16x96xf32> to vector<8x8xf32>
    %cst_81 = arith.constant dense<0.000000e+00> : vector<8x8xf32>
    %160 = tpu.matmul %157, %158, %cst_81 {dimension_numbers = #tpu.dot_dimension_numbers<[1], [1], [0], [0], [0, 0, 1, 0], [], []>} : vector<8x8xf32>, vector<8x8xf32>, vector<8x8xf32> -> vector<8x8xf32>
    %c1_82 = arith.constant 1 : index
    %c2_83 = arith.constant 2 : index
    %c0_84 = arith.constant 0 : index
    %c0_85 = arith.constant 0 : index
    %161 = vector.load %arg2[%c1_82, %c2_83, %c0_84, %c0_85] : memref<2x4x8x8xf32, #tpu.memory_space<vmem>>, vector<1x1x8x8xf32>
    %162 = vector.shape_cast %161 : vector<1x1x8x8xf32> to vector<8x8xf32>
    %163 = arith.addf %160, %162 : vector<8x8xf32>
    %cst_86 = arith.constant dense<0xFF800000> : vector<8xf32>
    %164 = vector.multi_reduction <maximumf>, %163, %cst_86 [1] : vector<8x8xf32> to vector<8xf32>
    %165 = vector.shape_cast %164 : vector<8xf32> to vector<8x1xf32>
    %166 = vector.broadcast %165 : vector<8x1xf32> to vector<8x8xf32>
    %167 = arith.subf %163, %166 : vector<8x8xf32>
    %168 = math.exp %167 : vector<8x8xf32>
    %cst_87 = arith.constant dense<0.000000e+00> : vector<8xf32>
    %169 = vector.multi_reduction <add>, %168, %cst_87 [1] : vector<8x8xf32> to vector<8xf32>
    %170 = vector.shape_cast %169 : vector<8xf32> to vector<8x1xf32>
    %171 = vector.broadcast %170 : vector<8x1xf32> to vector<8x8xf32>
    %172 = arith.divf %168, %171 : vector<8x8xf32>
    %cst_88 = arith.constant dense<0.000000e+00> : vector<8x8xf32>
    %173 = tpu.matmul %172, %159, %cst_88 {dimension_numbers = #tpu.dot_dimension_numbers<[1], [0], [0], [1], [0, 0, 1, 1], [], []>} : vector<8x8xf32>, vector<8x8xf32>, vector<8x8xf32> -> vector<8x8xf32>
    %c8_89 = arith.constant 8 : index
    %c16_90 = arith.constant 16 : index
    %174 = vector.load %arg9[%c8_89, %c16_90] : memref<16x32xf32, #tpu.memory_space<vmem>>, vector<8x8xf32>
    tpu.vector_store %arg9[%c8_89, %c16_90], %173 {strides = array<i32>} : memref<16x32xf32, #tpu.memory_space<vmem>>, vector<8x8xf32>,
    %175 = vector.extract_strided_slice %34 {offsets = [8, 24], sizes = [8, 8], strides = [1, 1]} : vector<16x96xf32> to vector<8x8xf32>
    %cst_91 = arith.constant 0.353553385 : f32
    %176 = vector.broadcast %cst_91 : f32 to vector<8x8xf32>
    %177 = arith.mulf %175, %176 : vector<8x8xf32>
    %178 = vector.extract_strided_slice %34 {offsets = [8, 56], sizes = [8, 8], strides = [1, 1]} : vector<16x96xf32> to vector<8x8xf32>
    %179 = vector.extract_strided_slice %34 {offsets = [8, 88], sizes = [8, 8], strides = [1, 1]} : vector<16x96xf32> to vector<8x8xf32>
    %cst_92 = arith.constant dense<0.000000e+00> : vector<8x8xf32>
    %180 = tpu.matmul %177, %178, %cst_92 {dimension_numbers = #tpu.dot_dimension_numbers<[1], [1], [0], [0], [0, 0, 1, 0], [], []>} : vector<8x8xf32>, vector<8x8xf32>, vector<8x8xf32> -> vector<8x8xf32>
    %c1_93 = arith.constant 1 : index
    %c3_94 = arith.constant 3 : index
    %c0_95 = arith.constant 0 : index
    %c0_96 = arith.constant 0 : index
    %181 = vector.load %arg2[%c1_93, %c3_94, %c0_95, %c0_96] : memref<2x4x8x8xf32, #tpu.memory_space<vmem>>, vector<1x1x8x8xf32>
    %182 = vector.shape_cast %181 : vector<1x1x8x8xf32> to vector<8x8xf32>
    %183 = arith.addf %180, %182 : vector<8x8xf32>
    %cst_97 = arith.constant dense<0xFF800000> : vector<8xf32>
    %184 = vector.multi_reduction <maximumf>, %183, %cst_97 [1] : vector<8x8xf32> to vector<8xf32>
    %185 = vector.shape_cast %184 : vector<8xf32> to vector<8x1xf32>
    %186 = vector.broadcast %185 : vector<8x1xf32> to vector<8x8xf32>
    %187 = arith.subf %183, %186 : vector<8x8xf32>
    %188 = math.exp %187 : vector<8x8xf32>
    %cst_98 = arith.constant dense<0.000000e+00> : vector<8xf32>
    %189 = vector.multi_reduction <add>, %188, %cst_98 [1] : vector<8x8xf32> to vector<8xf32>
    %190 = vector.shape_cast %189 : vector<8xf32> to vector<8x1xf32>
    %191 = vector.broadcast %190 : vector<8x1xf32> to vector<8x8xf32>
    %192 = arith.divf %188, %191 : vector<8x8xf32>
    %cst_99 = arith.constant dense<0.000000e+00> : vector<8x8xf32>
    %193 = tpu.matmul %192, %179, %cst_99 {dimension_numbers = #tpu.dot_dimension_numbers<[1], [0], [0], [1], [0, 0, 1, 1], [], []>} : vector<8x8xf32>, vector<8x8xf32>, vector<8x8xf32> -> vector<8x8xf32>
    %c8_100 = arith.constant 8 : index
    %c24_101 = arith.constant 24 : index
    %194 = vector.load %arg9[%c8_100, %c24_101] : memref<16x32xf32, #tpu.memory_space<vmem>>, vector<8x8xf32>
    tpu.vector_store %arg9[%c8_100, %c24_101], %193 {strides = array<i32>} : memref<16x32xf32, #tpu.memory_space<vmem>>, vector<8x8xf32>,
    %c0_102 = arith.constant 0 : index
    %c0_103 = arith.constant 0 : index
    %195 = vector.load %arg9[%c0_102, %c0_103] : memref<16x32xf32, #tpu.memory_space<vmem>>, vector<16x32xf32>
    %c0_104 = arith.constant 0 : index
    %c0_105 = arith.constant 0 : index
    %196 = vector.load %arg4[%c0_104, %c0_105] : memref<32x32xf32, #tpu.memory_space<vmem>>, vector<32x32xf32>
    %cst_106 = arith.constant dense<0.000000e+00> : vector<16x32xf32>
    %197 = tpu.matmul %195, %196, %cst_106 {dimension_numbers = #tpu.dot_dimension_numbers<[1], [0], [0], [1], [0, 0, 1, 1], [], []>} : vector<16x32xf32>, vector<32x32xf32>, vector<16x32xf32> -> vector<16x32xf32>
    %198 = vector.broadcast %4 : vector<1x32xf32> to vector<16x32xf32>
    %199 = arith.addf %197, %198 : vector<16x32xf32>
    %200 = arith.addf %0, %199 : vector<16x32xf32>
    %cst_107 = arith.constant dense<0.000000e+00> : vector<16xf32>
    %201 = vector.multi_reduction <add>, %200, %cst_107 [1] : vector<16x32xf32> to vector<16xf32>
    %202 = vector.shape_cast %201 : vector<16xf32> to vector<16x1xf32>
    %cst_108 = arith.constant 3.200000e+01 : f32
    %203 = vector.broadcast %cst_108 : f32 to vector<16x1xf32>
    %204 = arith.divf %202, %203 : vector<16x1xf32>
    %205 = vector.broadcast %204 : vector<16x1xf32> to vector<16x32xf32>
    %206 = arith.subf %200, %205 : vector<16x32xf32>
    %207 = arith.mulf %206, %206 : vector<16x32xf32>
    %cst_109 = arith.constant dense<0.000000e+00> : vector<16xf32>
    %208 = vector.multi_reduction <add>, %207, %cst_109 [1] : vector<16x32xf32> to vector<16xf32>
    %209 = vector.shape_cast %208 : vector<16xf32> to vector<16x1xf32>
    %cst_110 = arith.constant 3.200000e+01 : f32
    %210 = vector.broadcast %cst_110 : f32 to vector<16x1xf32>
    %211 = arith.divf %209, %210 : vector<16x1xf32>
    %212 = vector.broadcast %204 : vector<16x1xf32> to vector<16x32xf32>
    %213 = arith.subf %200, %212 : vector<16x32xf32>
    %cst_111 = arith.constant 9.99999974E-6 : f32
    %214 = vector.broadcast %cst_111 : f32 to vector<16x1xf32>
    %215 = arith.addf %211, %214 : vector<16x1xf32>
    %216 = math.rsqrt %215 : vector<16x1xf32>
    %217 = vector.broadcast %216 : vector<16x1xf32> to vector<16x32xf32>
    %218 = arith.mulf %213, %217 : vector<16x32xf32>
    %219 = vector.broadcast %5 : vector<1x32xf32> to vector<16x32xf32>
    %220 = arith.mulf %218, %219 : vector<16x32xf32>
    %221 = vector.broadcast %6 : vector<1x32xf32> to vector<16x32xf32>
    %222 = arith.addf %220, %221 : vector<16x32xf32>
    %c0_112 = arith.constant 0 : index
    %c0_113 = arith.constant 0 : index
    %223 = vector.load %arg5[%c0_112, %c0_113] : memref<32x64xf32, #tpu.memory_space<vmem>>, vector<32x64xf32>
    %cst_114 = arith.constant dense<0.000000e+00> : vector<16x64xf32>
    %224 = tpu.matmul %222, %223, %cst_114 {dimension_numbers = #tpu.dot_dimension_numbers<[1], [0], [0], [1], [0, 0, 1, 1], [], []>} : vector<16x32xf32>, vector<32x64xf32>, vector<16x64xf32> -> vector<16x64xf32>
    %225 = vector.broadcast %7 : vector<1x64xf32> to vector<16x64xf32>
    %226 = arith.addf %224, %225 : vector<16x64xf32>
    %cst_115 = arith.constant 5.000000e-01 : f32
    %227 = vector.broadcast %cst_115 : f32 to vector<16x64xf32>
    %228 = arith.mulf %227, %226 : vector<16x64xf32>
    %cst_116 = arith.constant 0.707106769 : f32
    %229 = vector.broadcast %cst_116 : f32 to vector<16x64xf32>
    %230 = arith.mulf %226, %229 : vector<16x64xf32>
    %cst_117 = arith.constant 0.000000e+00 : f32
    %231 = vector.broadcast %cst_117 : f32 to vector<16x64xf32>
    %232 = arith.cmpf oge, %230, %231 : vector<16x64xf32>
    %cst_118 = arith.constant 1.000000e+00 : f32
    %cst_119 = arith.constant -1.000000e+00 : f32
    %233 = vector.broadcast %cst_118 : f32 to vector<16x64xf32>
    %234 = vector.broadcast %cst_119 : f32 to vector<16x64xf32>
    %235 = arith.select %232, %233, %234 : vector<16x64xi1>, vector<16x64xf32>
    %236 = math.absf %230 : vector<16x64xf32>
    %cst_120 = arith.constant 0.327591091 : f32
    %237 = vector.broadcast %cst_120 : f32 to vector<16x64xf32>
    %238 = arith.mulf %237, %236 : vector<16x64xf32>
    %cst_121 = arith.constant 1.000000e+00 : f32
    %239 = vector.broadcast %cst_121 : f32 to vector<16x64xf32>
    %240 = arith.addf %239, %238 : vector<16x64xf32>
    %cst_122 = arith.constant 1.000000e+00 : f32
    %241 = vector.broadcast %cst_122 : f32 to vector<16x64xf32>
    %242 = arith.divf %241, %240 : vector<16x64xf32>
    %cst_123 = arith.constant 1.06140542 : f32
    %243 = vector.broadcast %cst_123 : f32 to vector<16x64xf32>
    %244 = arith.mulf %243, %242 : vector<16x64xf32>
    %cst_124 = arith.constant -1.45315206 : f32
    %245 = vector.broadcast %cst_124 : f32 to vector<16x64xf32>
    %246 = arith.addf %244, %245 : vector<16x64xf32>
    %247 = arith.mulf %246, %242 : vector<16x64xf32>
    %cst_125 = arith.constant 1.42141378 : f32
    %248 = vector.broadcast %cst_125 : f32 to vector<16x64xf32>
    %249 = arith.addf %247, %248 : vector<16x64xf32>
    %250 = arith.mulf %249, %242 : vector<16x64xf32>
    %cst_126 = arith.constant -0.284496725 : f32
    %251 = vector.broadcast %cst_126 : f32 to vector<16x64xf32>
    %252 = arith.addf %250, %251 : vector<16x64xf32>
    %253 = arith.mulf %252, %242 : vector<16x64xf32>
    %cst_127 = arith.constant 0.254829586 : f32
    %254 = vector.broadcast %cst_127 : f32 to vector<16x64xf32>
    %255 = arith.addf %253, %254 : vector<16x64xf32>
    %256 = arith.mulf %255, %242 : vector<16x64xf32>
    %cst_128 = arith.constant 0.000000e+00 : f32
    %257 = vector.broadcast %cst_128 : f32 to vector<16x64xf32>
    %258 = arith.subf %257, %236 : vector<16x64xf32>
    %259 = arith.mulf %258, %236 : vector<16x64xf32>
    %260 = math.exp %259 : vector<16x64xf32>
    %261 = arith.mulf %256, %260 : vector<16x64xf32>
    %cst_129 = arith.constant 1.000000e+00 : f32
    %262 = vector.broadcast %cst_129 : f32 to vector<16x64xf32>
    %263 = arith.subf %262, %261 : vector<16x64xf32>
    %264 = arith.mulf %235, %263 : vector<16x64xf32>
    %cst_130 = arith.constant 1.000000e+00 : f32
    %265 = vector.broadcast %cst_130 : f32 to vector<16x64xf32>
    %266 = arith.addf %265, %264 : vector<16x64xf32>
    %267 = arith.mulf %228, %266 : vector<16x64xf32>
    %c0_131 = arith.constant 0 : index
    %c0_132 = arith.constant 0 : index
    %268 = vector.load %arg6[%c0_131, %c0_132] : memref<64x32xf32, #tpu.memory_space<vmem>>, vector<64x32xf32>
    %cst_133 = arith.constant dense<0.000000e+00> : vector<16x32xf32>
    %269 = tpu.matmul %267, %268, %cst_133 {dimension_numbers = #tpu.dot_dimension_numbers<[1], [0], [0], [1], [0, 0, 1, 1], [], []>} : vector<16x64xf32>, vector<64x32xf32>, vector<16x32xf32> -> vector<16x32xf32>
    %270 = vector.broadcast %8 : vector<1x32xf32> to vector<16x32xf32>
    %271 = arith.addf %269, %270 : vector<16x32xf32>
    %272 = arith.addf %200, %271 : vector<16x32xf32>
    %c0_134 = arith.constant 0 : index
    %c0_135 = arith.constant 0 : index
    %273 = vector.load %arg8[%c0_134, %c0_135] : memref<16x32xf32, #tpu.memory_space<vmem>>, vector<16x32xf32>
    tpu.vector_store %arg8[%c0_134, %c0_135], %272 {strides = array<i32>} : memref<16x32xf32, #tpu.memory_space<vmem>>, vector<16x32xf32>,
    return
  }
  func.func @transform_0(%arg0: i32) -> (i32, i32) {
    %c0_i32 = arith.constant 0 : i32
    %c0_i32_0 = arith.constant 0 : i32
    %c0_i32_1 = arith.constant 0 : i32
    return %c0_i32, %c0_i32_0 : i32, i32
  }
  func.func @transform_1(%arg0: i32) -> (i32, i32, i32, i32) {
    %c0_i32 = arith.constant 0 : i32
    %c0_i32_0 = arith.constant 0 : i32
    %c0_i32_1 = arith.constant 0 : i32
    %c0_i32_2 = arith.constant 0 : i32
    %c0_i32_3 = arith.constant 0 : i32
    return %c0_i32, %c0_i32_0, %c0_i32_1, %c0_i32_2 : i32, i32, i32, i32
  }
  func.func @transform_2(%arg0: i32) -> (i32, i32) {
    %c0_i32 = arith.constant 0 : i32
    %c0_i32_0 = arith.constant 0 : i32
    %c0_i32_1 = arith.constant 0 : i32
    return %c0_i32, %c0_i32_0 : i32, i32
  }
  func.func @transform_3(%arg0: i32) -> (i32, i32) {
    %c0_i32 = arith.constant 0 : i32
    %c0_i32_0 = arith.constant 0 : i32
    %c0_i32_1 = arith.constant 0 : i32
    return %c0_i32, %c0_i32_0 : i32, i32
  }
  func.func @transform_4(%arg0: i32) -> (i32, i32) {
    %c0_i32 = arith.constant 0 : i32
    %c0_i32_0 = arith.constant 0 : i32
    %c0_i32_1 = arith.constant 0 : i32
    return %c0_i32, %c0_i32_0 : i32, i32
  }
  func.func @transform_5(%arg0: i32) -> (i32, i32) {
    %c0_i32 = arith.constant 0 : i32
    %c0_i32_0 = arith.constant 0 : i32
    %c0_i32_1 = arith.constant 0 : i32
    return %c0_i32, %c0_i32_0 : i32, i32
  }
  func.func @transform_6(%arg0: i32) -> (i32, i32) {
    %c0_i32 = arith.constant 0 : i32
    %c0_i32_0 = arith.constant 0 : i32
    %c0_i32_1 = arith.constant 0 : i32
    return %c0_i32, %c0_i32_0 : i32, i32
  }
  func.func @transform_7(%arg0: i32) -> (i32, i32) {
    %c0_i32 = arith.constant 0 : i32
    %c0_i32_0 = arith.constant 0 : i32
    %c0_i32_1 = arith.constant 0 : i32
    return %c0_i32, %c0_i32_0 : i32, i32
  }
}

</mosaic_0001>

<llo_original>
// kernel: tpu_custom_call.1
$region0: #{tpu_custom_call.1}
  #allocation0 [shape = 'u32[]', space=smem, size = 0x4, offset = 0x4, fixed_abs, tag = 'smem constant byte address 0x4 - core index']
  #allocation1 [shape = 'u32[144,128]{1,0:T(1,128)}', space=vmem, size = 0x12000, scoped, tag = 'internal scratch']
  #allocation2 [shape = 'f32[16,32]{1,0:T(8,128)}', space=vmem, size = 0x2000, scoped, tag = 'scratch operand']
  %s0 = inlined_call_operand.hbm [shape: f32[16,32], index: 0, kind: input, shape index: {}]
  %s1 = inlined_call_operand.vmem [shape: f32[2,4,8,8], index: 1, kind: input, shape index: {}]
  %s2 = inlined_call_operand.vmem [shape: f32[32,96], index: 2, kind: input, shape index: {}]
  %s3 = inlined_call_operand.hbm [shape: f32[32,32], index: 3, kind: input, shape index: {}]
  %s4 = inlined_call_operand.hbm [shape: f32[32,64], index: 4, kind: input, shape index: {}]
  %s5 = inlined_call_operand.vmem [shape: f32[64,32], index: 5, kind: input, shape index: {}]
  %s6 = inlined_call_operand.vmem [shape: f32[8,96], index: 6, kind: input, shape index: {}]
  %s7 = inlined_call_operand.hbm [shape: f32[16,32], index: 7, kind: output, shape index: {}]
  %s8 = sld [smem:[#allocation0]]
  $region50: #{tpu_custom_call.1} parent=0
    _
  %s10 = ssub.s32 1, %s8
  %s11 = scalar_select 0, %s10, %s8
  $region1: #{tpu_custom_call.1} parent=0
    #allocation3 [shape = 'u8[8192]{0}', space=vmem, size = 0x2000, scoped, tag = 'input window, operand 0, single buffered']
    #allocation4 [shape = 's32[1]{0}', space=sflag, size = 0x4, scoped, tag = 'scoped memory for tpu_custom_call.1']
    #allocation5 [shape = 's32[1]{0}', space=sflag, size = 0x4, scoped, tag = 'scoped memory for tpu_custom_call.1']
    #allocation6 [shape = 'u8[16384]{0}', space=vmem, size = 0x4000, scoped, tag = 'input window, operand 3, single buffered']
    #allocation7 [shape = 's32[1]{0}', space=sflag, size = 0x4, scoped, tag = 'scoped memory for tpu_custom_call.1']
    #allocation8 [shape = 'u8[16384]{0}', space=vmem, size = 0x4000, scoped, tag = 'input window, operand 4, single buffered']
    #allocation9 [shape = 'u8[8192]{0}', space=vmem, size = 0x2000, scoped, tag = 'output window, operand 0, single buffered']
    %12 = vsyncpa [#allocation4], 0
    %13 = vsyncpa [#allocation7], 0
    %14 = vsyncpa [#allocation5], 0
    // Predicated region
    $region2: #{tpu_custom_call.1} parent=1 // pred_check
      _
    $region3: #{tpu_custom_call.1} parent=1 // pred_check_branch
      %16 = sbr.rel (0) target = $region5
    $region4: #{tpu_custom_call.1} parent=1 // pred_region
      %s18 = ssub.s32 256, 256
      %19 = vsyncadd [#allocation4], %s18
      %s20 = sshll.u32 [#allocation3], 4
      %s21 = int_to_ptr.vmem [resolvable:$true] %s20
      %26 = dma.hbm_to_vmem [thread:$0]  %s0, 256, %s21, [#allocation4], 128, 128, 8
    $region5: #{tpu_custom_call.1} parent=1 // pred_fallthru
      _
    // Predicated region
    $region6: #{tpu_custom_call.1} parent=1 // pred_check
      _
    $region7: #{tpu_custom_call.1} parent=1 // pred_check_branch
      %28 = sbr.rel (0) target = $region9
    $region8: #{tpu_custom_call.1} parent=1 // pred_region
      _
    $region9: #{tpu_custom_call.1} parent=1 // pred_fallthru
      _
    // Predicated region
    $region10: #{tpu_custom_call.1} parent=1 // pred_check
      _
    $region11: #{tpu_custom_call.1} parent=1 // pred_check_branch
      %30 = sbr.rel (0) target = $region13
    $region12: #{tpu_custom_call.1} parent=1 // pred_region
      _
    $region13: #{tpu_custom_call.1} parent=1 // pred_fallthru
      _
    // Predicated region
    $region14: #{tpu_custom_call.1} parent=1 // pred_check
      _
    $region15: #{tpu_custom_call.1} parent=1 // pred_check_branch
      %32 = sbr.rel (0) target = $region17
    $region16: #{tpu_custom_call.1} parent=1 // pred_region
      %s34 = ssub.s32 512, 512
      %35 = vsyncadd [#allocation7], %s34
      %s36 = sshll.u32 [#allocation6], 4
      %s37 = int_to_ptr.vmem [resolvable:$true] %s36
      %42 = dma.hbm_to_vmem [thread:$0]  %s3, 512, %s37, [#allocation7], 128, 128, 8
    $region17: #{tpu_custom_call.1} parent=1 // pred_fallthru
      _
    // Predicated region
    $region18: #{tpu_custom_call.1} parent=1 // pred_check
      _
    $region19: #{tpu_custom_call.1} parent=1 // pred_check_branch
      %44 = sbr.rel (0) target = $region21
    $region20: #{tpu_custom_call.1} parent=1 // pred_region
      %s46 = ssub.s32 512, 512
      %47 = vsyncadd [#allocation7], %s46
      %s48 = sshll.u32 [#allocation8], 4
      %s49 = int_to_ptr.vmem [resolvable:$true] %s48
      %54 = dma.hbm_to_vmem [thread:$0]  %s4, 512, %s49, [#allocation7], 128, 128, 8
    $region21: #{tpu_custom_call.1} parent=1 // pred_fallthru
      _
    // Predicated region
    $region22: #{tpu_custom_call.1} parent=1 // pred_check
      _
    $region23: #{tpu_custom_call.1} parent=1 // pred_check_branch
      %56 = sbr.rel (0) target = $region25
    $region24: #{tpu_custom_call.1} parent=1 // pred_region
      _
    $region25: #{tpu_custom_call.1} parent=1 // pred_fallthru
      _
    // Predicated region
    $region26: #{tpu_custom_call.1} parent=1 // pred_check
      _
    $region27: #{tpu_custom_call.1} parent=1 // pred_check_branch
      %58 = sbr.rel (0) target = $region29
    $region28: #{tpu_custom_call.1} parent=1 // pred_region
      _
    $region29: #{tpu_custom_call.1} parent=1 // pred_fallthru
      _
    // Predicated region
    $region30: #{tpu_custom_call.1} parent=1 // pred_check
      _
    $region31: #{tpu_custom_call.1} parent=1 // pred_check_branch
      %60 = sbr.rel (0) target = $region33
    $region32: #{tpu_custom_call.1} parent=1 // pred_region
      %61 = dma.done [#allocation4], 256
    $region33: #{tpu_custom_call.1} parent=1 // pred_fallthru
      _
    // Predicated region
    $region34: #{tpu_custom_call.1} parent=1 // pred_check
      _
    $region35: #{tpu_custom_call.1} parent=1 // pred_check_branch
      %63 = sbr.rel (0) target = $region37
    $region36: #{tpu_custom_call.1} parent=1 // pred_region
      %64 = dma.done [#allocation7], 512
    $region37: #{tpu_custom_call.1} parent=1 // pred_fallthru
      _
    // Predicated region
    $region38: #{tpu_custom_call.1} parent=1 // pred_check
      _
    $region39: #{tpu_custom_call.1} parent=1 // pred_check_branch
      %66 = sbr.rel (0) target = $region41
    $region40: #{tpu_custom_call.1} parent=1 // pred_region
      %67 = dma.done [#allocation7], 512
    $region41: #{tpu_custom_call.1} parent=1 // pred_fallthru
      _
    %v68 = vld [vmem:[#allocation3] sm:$0xff]
    %v69 = vld [vmem:[#allocation3 + $0x8] sm:$0xff]
    %v70 = vld [vmem:[%s6] sm:$0x1]
    %v71 = vld [vmem:[%s6 + $0x1] sm:$0x1]
    %v72 = vld [vmem:[%s6 + $0x2] sm:$0x1]
    %v73 = vld [vmem:[%s6 + $0x3] sm:$0x1]
    %v74 = vld [vmem:[%s6 + $0x4] sm:$0x1]
    %v75 = vld [vmem:[%s6 + $0x5] sm:$0x1]
    %v76 = vld [vmem:[%s6 + $0x6] sm:$0x1]
    %v77 = vld [vmem:[%s6 + $0x7] sm:$0x1]
    %vm78 = vcmask 261120
    %v79 = vsel %vm78, %v68, 0.0
    %80 = vadd.xlane.f32.xlu0 %v79
    %v81 = vpop.xlane.xlu0 %80
    %v82 = vsel %vm78, %v69, 0.0
    %83 = vadd.xlane.f32.xlu0 %v82
    %v84 = vpop.xlane.xlu0 %83
    %v85 = vrcp.pop 32.0
    %v86 = vmul.f32 %v81, %v85
    %v87 = vmul.f32 %v84, %v85
    %v88 = vsub.f32 %v68, %v86
    %v89 = vsub.f32 %v69, %v87
    %v90 = vmul.f32 %v88, %v88
    %v91 = vmul.f32 %v89, %v89
    %v92 = vsel %vm78, %v90, 0.0
    %93 = vadd.xlane.f32.xlu0 %v92
    %v94 = vpop.xlane.xlu0 %93
    %v95 = vsel %vm78, %v91, 0.0
    %96 = vadd.xlane.f32.xlu0 %v95
    %v97 = vpop.xlane.xlu0 %96
    %v98 = vmul.f32 %v94, %v85
    %v99 = vmul.f32 %v97, %v85
    %v100 = vadd.f32 %v98, 1e-05
    %v101 = vadd.f32 %v99, 1e-05
    %v102 = vrsqrt.pop %v100
    %v103 = vrsqrt.pop %v101
    %v104 = vmul.f32 %v88, %v102
    %v105 = vmul.f32 %v89, %v103
    %v106 = vlaneseq
    %v107 = vshrl.u32 %v106, 7
    %v108 = vsub.s32 0, %v107
    %v109 = vrot.slane %v70, %v108
    %v110 = vmul.f32 %v104, %v109
    %v111 = vmul.f32 %v105, %v109
    %v112 = vlaneseq
    %v113 = vshrl.u32 %v112, 7
    %v114 = vsub.s32 0, %v113
    %v115 = vrot.slane %v71, %v114
    %v116 = vadd.f32 %v110, %v115
    %v117 = vadd.f32 %v111, %v115
    %v118 = vld [vmem:[%s2] sm:$0xff]
    %v119 = vld [vmem:[%s2 + $0x8] sm:$0xff]
    %v120 = vld [vmem:[%s2 + $0x10] sm:$0xff]
    %v121 = vld [vmem:[%s2 + $0x18] sm:$0xff]
    %v122 = vlaneseq
    %v123 = vshrl.u32 %v122, 7
    %v124 = vsub.s32 0, %v123
    %v125 = vrot.slane %v72, %v124
    %v127 = vsel %vm78, %v116, 0
    %v130 = vsel %vm78, %v117, 0
    %132 = vmatprep.subr.mxu0 0.0
    %133 = vmatpush1.msra.mxu0 %v118
    %134 = vmatprep.subr.mxu0 0.0
    %135 = vmatpush1.msra.mxu0 %v119
    %136 = vmatprep.subr.mxu0 0.0
    %137 = vmatpush1.msra.mxu0 %v120
    %138 = vmatprep.subr.mxu0 0.0
    %139 = vmatpush1.msra.mxu0 %v121
    %140 = vmatprep.subr.mxu0 0.0
    %141 = vmatpush1.msra.mxu0 0.0
    %142 = vmatprep.subr.mxu0 0.0
    %143 = vmatpush1.msra.mxu0 0.0
    %144 = vmatprep.subr.mxu0 0.0
    %145 = vmatpush1.msra.mxu0 0.0
    %146 = vmatprep.subr.mxu0 0.0
    %147 = vmatpush1.msra.mxu0 0.0
    %148 = vmatprep.subr.mxu0 0.0
    %149 = vmatpush1.msra.mxu0 0.0
    %150 = vmatprep.subr.mxu0 0.0
    %151 = vmatpush1.msra.mxu0 0.0
    %152 = vmatprep.subr.mxu0 0.0
    %153 = vmatpush1.msra.mxu0 0.0
    %154 = vmatprep.subr.mxu0 0.0
    %155 = vmatpush1.msra.mxu0 0.0
    %156 = vmatprep.subr.mxu0 0.0
    %157 = vmatpush1.msra.mxu0 0.0
    %158 = vmatprep.subr.mxu0 0.0
    %159 = vmatpush1.msra.mxu0 0.0
    %160 = vmatprep.subr.mxu0 0.0
    %161 = vmatpush1.msra.mxu0 0.0
    %162 = vmatprep.subr.mxu0 0.0
    %163 = vmatpush1.msra.mxu0 0.0
    %164 = vmatprep.subr.mxu0 0.0
    %165 = vmatpush1.msra.mxu0 0.0
    %166 = vmatprep.subr.mxu0 0.0
    %167 = vmatpush1.msra.mxu0 0.0
    %168 = vmatprep.subr.mxu0 0.0
    %169 = vmatpush1.msra.mxu0 0.0
    %170 = vmatprep.subr.mxu0 0.0
    %171 = vmatpush1.msra.mxu0 0.0
    %172 = vmatprep.subr.mxu0 0.0
    %173 = vmatpush1.msra.mxu0 0.0
    %174 = vmatprep.subr.mxu0 0.0
    %175 = vmatpush1.msra.mxu0 0.0
    %176 = vmatprep.subr.mxu0 0.0
    %177 = vmatpush1.msra.mxu0 0.0
    %178 = vmatprep.subr.mxu0 0.0
    %179 = vmatpush1.msra.mxu0 0.0
    %180 = vmatprep.subr.mxu0 0.0
    %181 = vmatpush1.msra.mxu0 0.0
    %182 = vmatprep.subr.mxu0 0.0
    %183 = vmatpush1.msra.mxu0 0.0
    %184 = vmatprep.subr.mxu0 0.0
    %185 = vmatpush1.msra.mxu0 0.0
    %186 = vmatprep.subr.mxu0 0.0
    %187 = vmatpush1.msra.mxu0 0.0
    %188 = vmatprep.subr.mxu0 0.0
    %189 = vmatpush1.msra.mxu0 0.0
    %190 = vmatprep.subr.mxu0 0.0
    %191 = vmatpush1.msra.mxu0 0.0
    %192 = vmatprep.subr.mxu0 0.0
    %193 = vmatpush1.msra.mxu0 0.0
    %194 = vmatprep.subr.mxu0 0.0
    %195 = vmatpush1.msra.mxu0 0.0
    %196 = vmatprep.mubr.f32.mxu0 0.0
    %197 = vmatmul.mubr.f32.gmra.mrb[0].mxu0 %v127
    %v198 = vpop.f32.mrb[0].mxu0
    %v199 = vadd.f32 %v125, %v198
    %v200 = vpop.f32.mrb[0].mxu0
    %201 = vmatprep.mubr.f32.mxu0 0.0
    %202 = vmatmul.mubr.f32.gmra.mrb[0].mxu0 %v130
    %v203 = vpop.f32.mrb[0].mxu0
    %v204 = vadd.f32 %v125, %v203
    %v205 = vpop.f32.mrb[0].mxu0
    %206 = vdwg.mxu0
    %v207 = vmul.f32 %v199, 0.35355338
    %v208 = vld [vmem:[%s1] sm:$0xff]
    %210 = vrot.lane.b32.xlu0 %v199, 96
    %v211 = vpop.permute.xlu0 %210
    %vm212 = vcmask 64512
    %v214 = vsel %vm212, %v207, 0
    %v216 = vsel %vm212, %v211, 0
    %218 = vmatprep.subr.mxu0 0.0
    %219 = vmatpush1.xpose.msra.mxu0 %v216
    %220 = vmatprep.subr.mxu0 0.0
    %221 = vmatpush1.xpose.msra.mxu0 0.0
    %222 = vmatprep.subr.mxu0 0.0
    %223 = vmatpush1.xpose.msra.mxu0 0.0
    %224 = vmatprep.subr.mxu0 0.0
    %225 = vmatpush1.xpose.msra.mxu0 0.0
    %226 = vmatprep.subr.mxu0 0.0
    %227 = vmatpush1.xpose.msra.mxu0 0.0
    %228 = vmatprep.subr.mxu0 0.0
    %229 = vmatpush1.xpose.msra.mxu0 0.0
    %230 = vmatprep.subr.mxu0 0.0
    %231 = vmatpush1.xpose.msra.mxu0 0.0
    %232 = vmatprep.subr.mxu0 0.0
    %233 = vmatpush1.xpose.msra.mxu0 0.0
    %234 = vmatprep.subr.mxu0 0.0
    %235 = vmatpush1.xpose.msra.mxu0 0.0
    %236 = vmatprep.subr.mxu0 0.0
    %237 = vmatpush1.xpose.msra.mxu0 0.0
    %238 = vmatprep.subr.mxu0 0.0
    %239 = vmatpush1.xpose.msra.mxu0 0.0
    %240 = vmatprep.subr.mxu0 0.0
    %241 = vmatpush1.xpose.msra.mxu0 0.0
    %242 = vmatprep.subr.mxu0 0.0
    %243 = vmatpush1.xpose.msra.mxu0 0.0
    %244 = vmatprep.subr.mxu0 0.0
    %245 = vmatpush1.xpose.msra.mxu0 0.0
    %246 = vmatprep.subr.mxu0 0.0
    %247 = vmatpush1.xpose.msra.mxu0 0.0
    %248 = vmatprep.subr.mxu0 0.0
    %249 = vmatpush1.xpose.msra.mxu0 0.0
    %250 = vmatprep.subr.mxu0 0.0
    %251 = vmatpush1.xpose.msra.mxu0 0.0
    %252 = vmatprep.subr.mxu0 0.0
    %253 = vmatpush1.xpose.msra.mxu0 0.0
    %254 = vmatprep.subr.mxu0 0.0
    %255 = vmatpush1.xpose.msra.mxu0 0.0
    %256 = vmatprep.subr.mxu0 0.0
    %257 = vmatpush1.xpose.msra.mxu0 0.0
    %258 = vmatprep.subr.mxu0 0.0
    %259 = vmatpush1.xpose.msra.mxu0 0.0
    %260 = vmatprep.subr.mxu0 0.0
    %261 = vmatpush1.xpose.msra.mxu0 0.0
    %262 = vmatprep.subr.mxu0 0.0
    %263 = vmatpush1.xpose.msra.mxu0 0.0
    %264 = vmatprep.subr.mxu0 0.0
    %265 = vmatpush1.xpose.msra.mxu0 0.0
    %266 = vmatprep.subr.mxu0 0.0
    %267 = vmatpush1.xpose.msra.mxu0 0.0
    %268 = vmatprep.subr.mxu0 0.0
    %269 = vmatpush1.xpose.msra.mxu0 0.0
    %270 = vmatprep.subr.mxu0 0.0
    %271 = vmatpush1.xpose.msra.mxu0 0.0
    %272 = vmatprep.subr.mxu0 0.0
    %273 = vmatpush1.xpose.msra.mxu0 0.0
    %274 = vmatprep.subr.mxu0 0.0
    %275 = vmatpush1.xpose.msra.mxu0 0.0
    %276 = vmatprep.subr.mxu0 0.0
    %277 = vmatpush1.xpose.msra.mxu0 0.0
    %278 = vmatprep.subr.mxu0 0.0
    %279 = vmatpush1.xpose.msra.mxu0 0.0
    %280 = vmatprep.subr.mxu0 0.0
    %281 = vmatpush1.xpose.msra.mxu0 0.0
    %282 = vmatprep.mubr.f32.mxu0 0.0
    %283 = vmatmul.mubr.f32.gmra.mrb[0].mxu0 %v214
    %v284 = vpop.f32.mrb[0].mxu0
    %v285 = vadd.f32 %v208, %v284
    %v286 = vpop.f32.mrb[0].mxu0
    %287 = vdwg.mxu0
    %v288 = vsel %vm212, %v285, -inf
    %289 = vmax.xlane.f32.xlu0 %v288
    %v290 = vpop.xlane.xlu0 %289
    %v291 = vsub.f32 %v285, %v290
    %v292 = vmul.f32 %v291, 1.442695
    %v293 = vpow.pop %v292
    %v294 = vsel %vm212, %v293, 0.0
    %295 = vadd.xlane.f32.xlu0 %v294
    %v296 = vpop.xlane.xlu0 %295
    %v297 = vrcp.pop %v296
    %v298 = vmul.f32 %v293, %v297
    %299 = vrot.lane.b32.xlu0 %v199, 64
    %v300 = vpop.permute.xlu0 %299
    %v303 = vsel %vm212, %v298, 0
    %305 = vmatprep.subr.mxu0 0.0
    %306 = vmatpush1.msra.mxu0 %v300
    %307 = vmatprep.subr.mxu0 0.0
    %308 = vmatpush1.msra.mxu0 0.0
    %309 = vmatprep.subr.mxu0 0.0
    %310 = vmatpush1.msra.mxu0 0.0
    %311 = vmatprep.subr.mxu0 0.0
    %312 = vmatpush1.msra.mxu0 0.0
    %313 = vmatprep.subr.mxu0 0.0
    %314 = vmatpush1.msra.mxu0 0.0
    %315 = vmatprep.subr.mxu0 0.0
    %316 = vmatpush1.msra.mxu0 0.0
    %317 = vmatprep.subr.mxu0 0.0
    %318 = vmatpush1.msra.mxu0 0.0
    %319 = vmatprep.subr.mxu0 0.0
    %320 = vmatpush1.msra.mxu0 0.0
    %321 = vmatprep.subr.mxu0 0.0
    %322 = vmatpush1.msra.mxu0 0.0
    %323 = vmatprep.subr.mxu0 0.0
    %324 = vmatpush1.msra.mxu0 0.0
    %325 = vmatprep.subr.mxu0 0.0
    %326 = vmatpush1.msra.mxu0 0.0
    %327 = vmatprep.subr.mxu0 0.0
    %328 = vmatpush1.msra.mxu0 0.0
    %329 = vmatprep.subr.mxu0 0.0
    %330 = vmatpush1.msra.mxu0 0.0
    %331 = vmatprep.subr.mxu0 0.0
    %332 = vmatpush1.msra.mxu0 0.0
    %333 = vmatprep.subr.mxu0 0.0
    %334 = vmatpush1.msra.mxu0 0.0
    %335 = vmatprep.subr.mxu0 0.0
    %336 = vmatpush1.msra.mxu0 0.0
    %337 = vmatprep.subr.mxu0 0.0
    %338 = vmatpush1.msra.mxu0 0.0
    %339 = vmatprep.subr.mxu0 0.0
    %340 = vmatpush1.msra.mxu0 0.0
    %341 = vmatprep.subr.mxu0 0.0
    %342 = vmatpush1.msra.mxu0 0.0
    %343 = vmatprep.subr.mxu0 0.0
    %344 = vmatpush1.msra.mxu0 0.0
    %345 = vmatprep.subr.mxu0 0.0
    %346 = vmatpush1.msra.mxu0 0.0
    %347 = vmatprep.subr.mxu0 0.0
    %348 = vmatpush1.msra.mxu0 0.0
    %349 = vmatprep.subr.mxu0 0.0
    %350 = vmatpush1.msra.mxu0 0.0
    %351 = vmatprep.subr.mxu0 0.0
    %352 = vmatpush1.msra.mxu0 0.0
    %353 = vmatprep.subr.mxu0 0.0
    %354 = vmatpush1.msra.mxu0 0.0
    %355 = vmatprep.subr.mxu0 0.0
    %356 = vmatpush1.msra.mxu0 0.0
    %357 = vmatprep.subr.mxu0 0.0
    %358 = vmatpush1.msra.mxu0 0.0
    %359 = vmatprep.subr.mxu0 0.0
    %360 = vmatpush1.msra.mxu0 0.0
    %361 = vmatprep.subr.mxu0 0.0
    %362 = vmatpush1.msra.mxu0 0.0
    %363 = vmatprep.subr.mxu0 0.0
    %364 = vmatpush1.msra.mxu0 0.0
    %365 = vmatprep.subr.mxu0 0.0
    %366 = vmatpush1.msra.mxu0 0.0
    %367 = vmatprep.subr.mxu0 0.0
    %368 = vmatpush1.msra.mxu0 0.0
    %369 = vmatprep.mubr.f32.mxu0 0.0
    %370 = vmatmul.mubr.f32.gmra.mrb[0].mxu0 %v303
    %v371 = vpop.f32.mrb[0].mxu0
    %v372 = vadd.f32 0.0, %v371
    %v373 = vpop.f32.mrb[0].mxu0
    %374 = vdwg.mxu0
    %375 = vst.msk [vmem:[#allocation2] sm:$0xff] %vm212, %v372
    %s376 = scalar_lea.vmem %s1, 8
    %v377 = vld [vmem:[%s376] sm:$0xff]
    %378 = vrot.lane.b32.xlu0 %v207, 120
    %v379 = vpop.permute.xlu0 %378
    %380 = vrot.lane.b32.xlu0 %v199, 88
    %v381 = vpop.permute.xlu0 %380
    %v382 = vsel %vm212, %v379, 0
    %v384 = vsel %vm212, %v381, 0
    %386 = vmatprep.subr.mxu0 0.0
    %387 = vmatpush1.xpose.msra.mxu0 %v384
    %388 = vmatprep.subr.mxu0 0.0
    %389 = vmatpush1.xpose.msra.mxu0 0.0
    %390 = vmatprep.subr.mxu0 0.0
    %391 = vmatpush1.xpose.msra.mxu0 0.0
    %392 = vmatprep.subr.mxu0 0.0
    %393 = vmatpush1.xpose.msra.mxu0 0.0
    %394 = vmatprep.subr.mxu0 0.0
    %395 = vmatpush1.xpose.msra.mxu0 0.0
    %396 = vmatprep.subr.mxu0 0.0
    %397 = vmatpush1.xpose.msra.mxu0 0.0
    %398 = vmatprep.subr.mxu0 0.0
    %399 = vmatpush1.xpose.msra.mxu0 0.0
    %400 = vmatprep.subr.mxu0 0.0
    %401 = vmatpush1.xpose.msra.mxu0 0.0
    %402 = vmatprep.subr.mxu0 0.0
    %403 = vmatpush1.xpose.msra.mxu0 0.0
    %404 = vmatprep.subr.mxu0 0.0
    %405 = vmatpush1.xpose.msra.mxu0 0.0
    %406 = vmatprep.subr.mxu0 0.0
    %407 = vmatpush1.xpose.msra.mxu0 0.0
    %408 = vmatprep.subr.mxu0 0.0
    %409 = vmatpush1.xpose.msra.mxu0 0.0
    %410 = vmatprep.subr.mxu0 0.0
    %411 = vmatpush1.xpose.msra.mxu0 0.0
    %412 = vmatprep.subr.mxu0 0.0
    %413 = vmatpush1.xpose.msra.mxu0 0.0
    %414 = vmatprep.subr.mxu0 0.0
    %415 = vmatpush1.xpose.msra.mxu0 0.0
    %416 = vmatprep.subr.mxu0 0.0
    %417 = vmatpush1.xpose.msra.mxu0 0.0
    %418 = vmatprep.subr.mxu0 0.0
    %419 = vmatpush1.xpose.msra.mxu0 0.0
    %420 = vmatprep.subr.mxu0 0.0
    %421 = vmatpush1.xpose.msra.mxu0 0.0
    %422 = vmatprep.subr.mxu0 0.0
    %423 = vmatpush1.xpose.msra.mxu0 0.0
    %424 = vmatprep.subr.mxu0 0.0
    %425 = vmatpush1.xpose.msra.mxu0 0.0
    %426 = vmatprep.subr.mxu0 0.0
    %427 = vmatpush1.xpose.msra.mxu0 0.0
    %428 = vmatprep.subr.mxu0 0.0
    %429 = vmatpush1.xpose.msra.mxu0 0.0
    %430 = vmatprep.subr.mxu0 0.0
    %431 = vmatpush1.xpose.msra.mxu0 0.0
    %432 = vmatprep.subr.mxu0 0.0
    %433 = vmatpush1.xpose.msra.mxu0 0.0
    %434 = vmatprep.subr.mxu0 0.0
    %435 = vmatpush1.xpose.msra.mxu0 0.0
    %436 = vmatprep.subr.mxu0 0.0
    %437 = vmatpush1.xpose.msra.mxu0 0.0
    %438 = vmatprep.subr.mxu0 0.0
    %439 = vmatpush1.xpose.msra.mxu0 0.0
    %440 = vmatprep.subr.mxu0 0.0
    %441 = vmatpush1.xpose.msra.mxu0 0.0
    %442 = vmatprep.subr.mxu0 0.0
    %443 = vmatpush1.xpose.msra.mxu0 0.0
    %444 = vmatprep.subr.mxu0 0.0
    %445 = vmatpush1.xpose.msra.mxu0 0.0
    %446 = vmatprep.subr.mxu0 0.0
    %447 = vmatpush1.xpose.msra.mxu0 0.0
    %448 = vmatprep.subr.mxu0 0.0
    %449 = vmatpush1.xpose.msra.mxu0 0.0
    %450 = vmatprep.mubr.f32.mxu0 0.0
    %451 = vmatmul.mubr.f32.gmra.mrb[0].mxu0 %v382
    %v452 = vpop.f32.mrb[0].mxu0
    %v453 = vadd.f32 %v377, %v452
    %v454 = vpop.f32.mrb[0].mxu0
    %455 = vdwg.mxu0
    %v456 = vsel %vm212, %v453, -inf
    %457 = vmax.xlane.f32.xlu0 %v456
    %v458 = vpop.xlane.xlu0 %457
    %v459 = vsub.f32 %v453, %v458
    %v460 = vmul.f32 %v459, 1.442695
    %v461 = vpow.pop %v460
    %v462 = vsel %vm212, %v461, 0.0
    %463 = vadd.xlane.f32.xlu0 %v462
    %v464 = vpop.xlane.xlu0 %463
    %v465 = vrcp.pop %v464
    %v466 = vmul.f32 %v461, %v465
    %467 = vrot.lane.b32.xlu0 %v199, 56
    %v468 = vpop.permute.xlu0 %467
    %v471 = vsel %vm212, %v466, 0
    %473 = vmatprep.subr.mxu0 0.0
    %474 = vmatpush1.msra.mxu0 %v468
    %475 = vmatprep.subr.mxu0 0.0
    %476 = vmatpush1.msra.mxu0 0.0
    %477 = vmatprep.subr.mxu0 0.0
    %478 = vmatpush1.msra.mxu0 0.0
    %479 = vmatprep.subr.mxu0 0.0
    %480 = vmatpush1.msra.mxu0 0.0
    %481 = vmatprep.subr.mxu0 0.0
    %482 = vmatpush1.msra.mxu0 0.0
    %483 = vmatprep.subr.mxu0 0.0
    %484 = vmatpush1.msra.mxu0 0.0
    %485 = vmatprep.subr.mxu0 0.0
    %486 = vmatpush1.msra.mxu0 0.0
    %487 = vmatprep.subr.mxu0 0.0
    %488 = vmatpush1.msra.mxu0 0.0
    %489 = vmatprep.subr.mxu0 0.0
    %490 = vmatpush1.msra.mxu0 0.0
    %491 = vmatprep.subr.mxu0 0.0
    %492 = vmatpush1.msra.mxu0 0.0
    %493 = vmatprep.subr.mxu0 0.0
    %494 = vmatpush1.msra.mxu0 0.0
    %495 = vmatprep.subr.mxu0 0.0
    %496 = vmatpush1.msra.mxu0 0.0
    %497 = vmatprep.subr.mxu0 0.0
    %498 = vmatpush1.msra.mxu0 0.0
    %499 = vmatprep.subr.mxu0 0.0
    %500 = vmatpush1.msra.mxu0 0.0
    %501 = vmatprep.subr.mxu0 0.0
    %502 = vmatpush1.msra.mxu0 0.0
    %503 = vmatprep.subr.mxu0 0.0
    %504 = vmatpush1.msra.mxu0 0.0
    %505 = vmatprep.subr.mxu0 0.0
    %506 = vmatpush1.msra.mxu0 0.0
    %507 = vmatprep.subr.mxu0 0.0
    %508 = vmatpush1.msra.mxu0 0.0
    %509 = vmatprep.subr.mxu0 0.0
    %510 = vmatpush1.msra.mxu0 0.0
    %511 = vmatprep.subr.mxu0 0.0
    %512 = vmatpush1.msra.mxu0 0.0
    %513 = vmatprep.subr.mxu0 0.0
    %514 = vmatpush1.msra.mxu0 0.0
    %515 = vmatprep.subr.mxu0 0.0
    %516 = vmatpush1.msra.mxu0 0.0
    %517 = vmatprep.subr.mxu0 0.0
    %518 = vmatpush1.msra.mxu0 0.0
    %519 = vmatprep.subr.mxu0 0.0
    %520 = vmatpush1.msra.mxu0 0.0
    %521 = vmatprep.subr.mxu0 0.0
    %522 = vmatpush1.msra.mxu0 0.0
    %523 = vmatprep.subr.mxu0 0.0
    %524 = vmatpush1.msra.mxu0 0.0
    %525 = vmatprep.subr.mxu0 0.0
    %526 = vmatpush1.msra.mxu0 0.0
    %527 = vmatprep.subr.mxu0 0.0
    %528 = vmatpush1.msra.mxu0 0.0
    %529 = vmatprep.subr.mxu0 0.0
    %530 = vmatpush1.msra.mxu0 0.0
    %531 = vmatprep.subr.mxu0 0.0
    %532 = vmatpush1.msra.mxu0 0.0
    %533 = vmatprep.subr.mxu0 0.0
    %534 = vmatpush1.msra.mxu0 0.0
    %535 = vmatprep.subr.mxu0 0.0
    %536 = vmatpush1.msra.mxu0 0.0
    %537 = vmatprep.mubr.f32.mxu0 0.0
    %538 = vmatmul.mubr.f32.gmra.mrb[0].mxu0 %v471
    %v539 = vpop.f32.mrb[0].mxu0
    %v540 = vadd.f32 0.0, %v539
    %v541 = vpop.f32.mrb[0].mxu0
    %542 = vdwg.mxu0
    %544 = vrot.lane.b32.xlu0 %v540, 8
    %v545 = vpop.permute.xlu0 %544
    %vm547 = vcmask 130112
    %548 = vst.msk [vmem:[#allocation2] sm:$0xff] %vm547, %v545
    %s549 = scalar_lea.vmem %s1, 16
    %v550 = vld [vmem:[%s549] sm:$0xff]
    %551 = vrot.lane.b32.xlu0 %v207, 112
    %v552 = vpop.permute.xlu0 %551
    %553 = vrot.lane.b32.xlu0 %v199, 80
    %v554 = vpop.permute.xlu0 %553
    %v555 = vsel %vm212, %v552, 0
    %v557 = vsel %vm212, %v554, 0
    %559 = vmatprep.subr.mxu0 0.0
    %560 = vmatpush1.xpose.msra.mxu0 %v557
    %561 = vmatprep.subr.mxu0 0.0
    %562 = vmatpush1.xpose.msra.mxu0 0.0
    %563 = vmatprep.subr.mxu0 0.0
    %564 = vmatpush1.xpose.msra.mxu0 0.0
    %565 = vmatprep.subr.mxu0 0.0
    %566 = vmatpush1.xpose.msra.mxu0 0.0
    %567 = vmatprep.subr.mxu0 0.0
    %568 = vmatpush1.xpose.msra.mxu0 0.0
    %569 = vmatprep.subr.mxu0 0.0
    %570 = vmatpush1.xpose.msra.mxu0 0.0
    %571 = vmatprep.subr.mxu0 0.0
    %572 = vmatpush1.xpose.msra.mxu0 0.0
    %573 = vmatprep.subr.mxu0 0.0
    %574 = vmatpush1.xpose.msra.mxu0 0.0
    %575 = vmatprep.subr.mxu0 0.0
    %576 = vmatpush1.xpose.msra.mxu0 0.0
    %577 = vmatprep.subr.mxu0 0.0
    %578 = vmatpush1.xpose.msra.mxu0 0.0
    %579 = vmatprep.subr.mxu0 0.0
    %580 = vmatpush1.xpose.msra.mxu0 0.0
    %581 = vmatprep.subr.mxu0 0.0
    %582 = vmatpush1.xpose.msra.mxu0 0.0
    %583 = vmatprep.subr.mxu0 0.0
    %584 = vmatpush1.xpose.msra.mxu0 0.0
    %585 = vmatprep.subr.mxu0 0.0
    %586 = vmatpush1.xpose.msra.mxu0 0.0
    %587 = vmatprep.subr.mxu0 0.0
    %588 = vmatpush1.xpose.msra.mxu0 0.0
    %589 = vmatprep.subr.mxu0 0.0
    %590 = vmatpush1.xpose.msra.mxu0 0.0
    %591 = vmatprep.subr.mxu0 0.0
    %592 = vmatpush1.xpose.msra.mxu0 0.0
    %593 = vmatprep.subr.mxu0 0.0
    %594 = vmatpush1.xpose.msra.mxu0 0.0
    %595 = vmatprep.subr.mxu0 0.0
    %596 = vmatpush1.xpose.msra.mxu0 0.0
    %597 = vmatprep.subr.mxu0 0.0
    %598 = vmatpush1.xpose.msra.mxu0 0.0
    %599 = vmatprep.subr.mxu0 0.0
    %600 = vmatpush1.xpose.msra.mxu0 0.0
    %601 = vmatprep.subr.mxu0 0.0
    %602 = vmatpush1.xpose.msra.mxu0 0.0
    %603 = vmatprep.subr.mxu0 0.0
    %604 = vmatpush1.xpose.msra.mxu0 0.0
    %605 = vmatprep.subr.mxu0 0.0
    %606 = vmatpush1.xpose.msra.mxu0 0.0
    %607 = vmatprep.subr.mxu0 0.0
    %608 = vmatpush1.xpose.msra.mxu0 0.0
    %609 = vmatprep.subr.mxu0 0.0
    %610 = vmatpush1.xpose.msra.mxu0 0.0
    %611 = vmatprep.subr.mxu0 0.0
    %612 = vmatpush1.xpose.msra.mxu0 0.0
    %613 = vmatprep.subr.mxu0 0.0
    %614 = vmatpush1.xpose.msra.mxu0 0.0
    %615 = vmatprep.subr.mxu0 0.0
    %616 = vmatpush1.xpose.msra.mxu0 0.0
    %617 = vmatprep.subr.mxu0 0.0
    %618 = vmatpush1.xpose.msra.mxu0 0.0
    %619 = vmatprep.subr.mxu0 0.0
    %620 = vmatpush1.xpose.msra.mxu0 0.0
    %621 = vmatprep.subr.mxu0 0.0
    %622 = vmatpush1.xpose.msra.mxu0 0.0
    %623 = vmatprep.mubr.f32.mxu0 0.0
    %624 = vmatmul.mubr.f32.gmra.mrb[0].mxu0 %v555
    %v625 = vpop.f32.mrb[0].mxu0
    %v626 = vadd.f32 %v550, %v625
    %v627 = vpop.f32.mrb[0].mxu0
    %628 = vdwg.mxu0
    %v629 = vsel %vm212, %v626, -inf
    %630 = vmax.xlane.f32.xlu0 %v629
    %v631 = vpop.xlane.xlu0 %630
    %v632 = vsub.f32 %v626, %v631
    %v633 = vmul.f32 %v632, 1.442695
    %v634 = vpow.pop %v633
    %v635 = vsel %vm212, %v634, 0.0
    %636 = vadd.xlane.f32.xlu0 %v635
    %v637 = vpop.xlane.xlu0 %636
    %v638 = vrcp.pop %v637
    %v639 = vmul.f32 %v634, %v638
    %640 = vrot.lane.b32.xlu0 %v199, 48
    %v641 = vpop.permute.xlu0 %640
    %v644 = vsel %vm212, %v639, 0
    %646 = vmatprep.subr.mxu0 0.0
    %647 = vmatpush1.msra.mxu0 %v641
    %648 = vmatprep.subr.mxu0 0.0
    %649 = vmatpush1.msra.mxu0 0.0
    %650 = vmatprep.subr.mxu0 0.0
    %651 = vmatpush1.msra.mxu0 0.0
    %652 = vmatprep.subr.mxu0 0.0
    %653 = vmatpush1.msra.mxu0 0.0
    %654 = vmatprep.subr.mxu0 0.0
    %655 = vmatpush1.msra.mxu0 0.0
    %656 = vmatprep.subr.mxu0 0.0
    %657 = vmatpush1.msra.mxu0 0.0
    %658 = vmatprep.subr.mxu0 0.0
    %659 = vmatpush1.msra.mxu0 0.0
    %660 = vmatprep.subr.mxu0 0.0
    %661 = vmatpush1.msra.mxu0 0.0
    %662 = vmatprep.subr.mxu0 0.0
    %663 = vmatpush1.msra.mxu0 0.0
    %664 = vmatprep.subr.mxu0 0.0
    %665 = vmatpush1.msra.mxu0 0.0
    %666 = vmatprep.subr.mxu0 0.0
    %667 = vmatpush1.msra.mxu0 0.0
    %668 = vmatprep.subr.mxu0 0.0
    %669 = vmatpush1.msra.mxu0 0.0
    %670 = vmatprep.subr.mxu0 0.0
    %671 = vmatpush1.msra.mxu0 0.0
    %672 = vmatprep.subr.mxu0 0.0
    %673 = vmatpush1.msra.mxu0 0.0
    %674 = vmatprep.subr.mxu0 0.0
    %675 = vmatpush1.msra.mxu0 0.0
    %676 = vmatprep.subr.mxu0 0.0
    %677 = vmatpush1.msra.mxu0 0.0
    %678 = vmatprep.subr.mxu0 0.0
    %679 = vmatpush1.msra.mxu0 0.0
    %680 = vmatprep.subr.mxu0 0.0
    %681 = vmatpush1.msra.mxu0 0.0
    %682 = vmatprep.subr.mxu0 0.0
    %683 = vmatpush1.msra.mxu0 0.0
    %684 = vmatprep.subr.mxu0 0.0
    %685 = vmatpush1.msra.mxu0 0.0
    %686 = vmatprep.subr.mxu0 0.0
    %687 = vmatpush1.msra.mxu0 0.0
    %688 = vmatprep.subr.mxu0 0.0
    %689 = vmatpush1.msra.mxu0 0.0
    %690 = vmatprep.subr.mxu0 0.0
    %691 = vmatpush1.msra.mxu0 0.0
    %692 = vmatprep.subr.mxu0 0.0
    %693 = vmatpush1.msra.mxu0 0.0
    %694 = vmatprep.subr.mxu0 0.0
    %695 = vmatpush1.msra.mxu0 0.0
    %696 = vmatprep.subr.mxu0 0.0
    %697 = vmatpush1.msra.mxu0 0.0
    %698 = vmatprep.subr.mxu0 0.0
    %699 = vmatpush1.msra.mxu0 0.0
    %700 = vmatprep.subr.mxu0 0.0
    %701 = vmatpush1.msra.mxu0 0.0
    %702 = vmatprep.subr.mxu0 0.0
    %703 = vmatpush1.msra.mxu0 0.0
    %704 = vmatprep.subr.mxu0 0.0
    %705 = vmatpush1.msra.mxu0 0.0
    %706 = vmatprep.subr.mxu0 0.0
    %707 = vmatpush1.msra.mxu0 0.0
    %708 = vmatprep.subr.mxu0 0.0
    %709 = vmatpush1.msra.mxu0 0.0
    %710 = vmatprep.mubr.f32.mxu0 0.0
    %711 = vmatmul.mubr.f32.gmra.mrb[0].mxu0 %v644
    %v712 = vpop.f32.mrb[0].mxu0
    %v713 = vadd.f32 0.0, %v712
    %v714 = vpop.f32.mrb[0].mxu0
    %715 = vdwg.mxu0
    %717 = vrot.lane.b32.xlu0 %v713, 16
    %v718 = vpop.permute.xlu0 %717
    %vm720 = vcmask 195712
    %721 = vst.msk [vmem:[#allocation2] sm:$0xff] %vm720, %v718
    %s722 = scalar_lea.vmem %s1, 24
    %v723 = vld [vmem:[%s722] sm:$0xff]
    %724 = vrot.lane.b32.xlu0 %v207, 104
    %v725 = vpop.permute.xlu0 %724
    %726 = vrot.lane.b32.xlu0 %v199, 72
    %v727 = vpop.permute.xlu0 %726
    %v728 = vsel %vm212, %v725, 0
    %v730 = vsel %vm212, %v727, 0
    %732 = vmatprep.subr.mxu0 0.0
    %733 = vmatpush1.xpose.msra.mxu0 %v730
    %734 = vmatprep.subr.mxu0 0.0
    %735 = vmatpush1.xpose.msra.mxu0 0.0
    %736 = vmatprep.subr.mxu0 0.0
    %737 = vmatpush1.xpose.msra.mxu0 0.0
    %738 = vmatprep.subr.mxu0 0.0
    %739 = vmatpush1.xpose.msra.mxu0 0.0
    %740 = vmatprep.subr.mxu0 0.0
    %741 = vmatpush1.xpose.msra.mxu0 0.0
    %742 = vmatprep.subr.mxu0 0.0
    %743 = vmatpush1.xpose.msra.mxu0 0.0
    %744 = vmatprep.subr.mxu0 0.0
    %745 = vmatpush1.xpose.msra.mxu0 0.0
    %746 = vmatprep.subr.mxu0 0.0
    %747 = vmatpush1.xpose.msra.mxu0 0.0
    %748 = vmatprep.subr.mxu0 0.0
    %749 = vmatpush1.xpose.msra.mxu0 0.0
    %750 = vmatprep.subr.mxu0 0.0
    %751 = vmatpush1.xpose.msra.mxu0 0.0
    %752 = vmatprep.subr.mxu0 0.0
    %753 = vmatpush1.xpose.msra.mxu0 0.0
    %754 = vmatprep.subr.mxu0 0.0
    %755 = vmatpush1.xpose.msra.mxu0 0.0
    %756 = vmatprep.subr.mxu0 0.0
    %757 = vmatpush1.xpose.msra.mxu0 0.0
    %758 = vmatprep.subr.mxu0 0.0
    %759 = vmatpush1.xpose.msra.mxu0 0.0
    %760 = vmatprep.subr.mxu0 0.0
    %761 = vmatpush1.xpose.msra.mxu0 0.0
    %762 = vmatprep.subr.mxu0 0.0
    %763 = vmatpush1.xpose.msra.mxu0 0.0
    %764 = vmatprep.subr.mxu0 0.0
    %765 = vmatpush1.xpose.msra.mxu0 0.0
    %766 = vmatprep.subr.mxu0 0.0
    %767 = vmatpush1.xpose.msra.mxu0 0.0
    %768 = vmatprep.subr.mxu0 0.0
    %769 = vmatpush1.xpose.msra.mxu0 0.0
    %770 = vmatprep.subr.mxu0 0.0
    %771 = vmatpush1.xpose.msra.mxu0 0.0
    %772 = vmatprep.subr.mxu0 0.0
    %773 = vmatpush1.xpose.msra.mxu0 0.0
    %774 = vmatprep.subr.mxu0 0.0
    %775 = vmatpush1.xpose.msra.mxu0 0.0
    %776 = vmatprep.subr.mxu0 0.0
    %777 = vmatpush1.xpose.msra.mxu0 0.0
    %778 = vmatprep.subr.mxu0 0.0
    %779 = vmatpush1.xpose.msra.mxu0 0.0
    %780 = vmatprep.subr.mxu0 0.0
    %781 = vmatpush1.xpose.msra.mxu0 0.0
    %782 = vmatprep.subr.mxu0 0.0
    %783 = vmatpush1.xpose.msra.mxu0 0.0
    %784 = vmatprep.subr.mxu0 0.0
    %785 = vmatpush1.xpose.msra.mxu0 0.0
    %786 = vmatprep.subr.mxu0 0.0
    %787 = vmatpush1.xpose.msra.mxu0 0.0
    %788 = vmatprep.subr.mxu0 0.0
    %789 = vmatpush1.xpose.msra.mxu0 0.0
    %790 = vmatprep.subr.mxu0 0.0
    %791 = vmatpush1.xpose.msra.mxu0 0.0
    %792 = vmatprep.subr.mxu0 0.0
    %793 = vmatpush1.xpose.msra.mxu0 0.0
    %794 = vmatprep.subr.mxu0 0.0
    %795 = vmatpush1.xpose.msra.mxu0 0.0
    %796 = vmatprep.mubr.f32.mxu0 0.0
    %797 = vmatmul.mubr.f32.gmra.mrb[0].mxu0 %v728
    %v798 = vpop.f32.mrb[0].mxu0
    %v799 = vadd.f32 %v723, %v798
    %v800 = vpop.f32.mrb[0].mxu0
    %801 = vdwg.mxu0
    %v802 = vsel %vm212, %v799, -inf
    %803 = vmax.xlane.f32.xlu0 %v802
    %v804 = vpop.xlane.xlu0 %803
    %v805 = vsub.f32 %v799, %v804
    %v806 = vmul.f32 %v805, 1.442695
    %v807 = vpow.pop %v806
    %v808 = vsel %vm212, %v807, 0.0
    %809 = vadd.xlane.f32.xlu0 %v808
    %v810 = vpop.xlane.xlu0 %809
    %v811 = vrcp.pop %v810
    %v812 = vmul.f32 %v807, %v811
    %813 = vrot.lane.b32.xlu0 %v199, 40
    %v814 = vpop.permute.xlu0 %813
    %v817 = vsel %vm212, %v812, 0
    %819 = vmatprep.subr.mxu0 0.0
    %820 = vmatpush1.msra.mxu0 %v814
    %821 = vmatprep.subr.mxu0 0.0
    %822 = vmatpush1.msra.mxu0 0.0
    %823 = vmatprep.subr.mxu0 0.0
    %824 = vmatpush1.msra.mxu0 0.0
    %825 = vmatprep.subr.mxu0 0.0
    %826 = vmatpush1.msra.mxu0 0.0
    %827 = vmatprep.subr.mxu0 0.0
    %828 = vmatpush1.msra.mxu0 0.0
    %829 = vmatprep.subr.mxu0 0.0
    %830 = vmatpush1.msra.mxu0 0.0
    %831 = vmatprep.subr.mxu0 0.0
    %832 = vmatpush1.msra.mxu0 0.0
    %833 = vmatprep.subr.mxu0 0.0
    %834 = vmatpush1.msra.mxu0 0.0
    %835 = vmatprep.subr.mxu0 0.0
    %836 = vmatpush1.msra.mxu0 0.0
    %837 = vmatprep.subr.mxu0 0.0
    %838 = vmatpush1.msra.mxu0 0.0
    %839 = vmatprep.subr.mxu0 0.0
    %840 = vmatpush1.msra.mxu0 0.0
    %841 = vmatprep.subr.mxu0 0.0
    %842 = vmatpush1.msra.mxu0 0.0
    %843 = vmatprep.subr.mxu0 0.0
    %844 = vmatpush1.msra.mxu0 0.0
    %845 = vmatprep.subr.mxu0 0.0
    %846 = vmatpush1.msra.mxu0 0.0
    %847 = vmatprep.subr.mxu0 0.0
    %848 = vmatpush1.msra.mxu0 0.0
    %849 = vmatprep.subr.mxu0 0.0
    %850 = vmatpush1.msra.mxu0 0.0
    %851 = vmatprep.subr.mxu0 0.0
    %852 = vmatpush1.msra.mxu0 0.0
    %853 = vmatprep.subr.mxu0 0.0
    %854 = vmatpush1.msra.mxu0 0.0
    %855 = vmatprep.subr.mxu0 0.0
    %856 = vmatpush1.msra.mxu0 0.0
    %857 = vmatprep.subr.mxu0 0.0
    %858 = vmatpush1.msra.mxu0 0.0
    %859 = vmatprep.subr.mxu0 0.0
    %860 = vmatpush1.msra.mxu0 0.0
    %861 = vmatprep.subr.mxu0 0.0
    %862 = vmatpush1.msra.mxu0 0.0
    %863 = vmatprep.subr.mxu0 0.0
    %864 = vmatpush1.msra.mxu0 0.0
    %865 = vmatprep.subr.mxu0 0.0
    %866 = vmatpush1.msra.mxu0 0.0
    %867 = vmatprep.subr.mxu0 0.0
    %868 = vmatpush1.msra.mxu0 0.0
    %869 = vmatprep.subr.mxu0 0.0
    %870 = vmatpush1.msra.mxu0 0.0
    %871 = vmatprep.subr.mxu0 0.0
    %872 = vmatpush1.msra.mxu0 0.0
    %873 = vmatprep.subr.mxu0 0.0
    %874 = vmatpush1.msra.mxu0 0.0
    %875 = vmatprep.subr.mxu0 0.0
    %876 = vmatpush1.msra.mxu0 0.0
    %877 = vmatprep.subr.mxu0 0.0
    %878 = vmatpush1.msra.mxu0 0.0
    %879 = vmatprep.subr.mxu0 0.0
    %880 = vmatpush1.msra.mxu0 0.0
    %881 = vmatprep.subr.mxu0 0.0
    %882 = vmatpush1.msra.mxu0 0.0
    %883 = vmatprep.mubr.f32.mxu0 0.0
    %884 = vmatmul.mubr.f32.gmra.mrb[0].mxu0 %v817
    %v885 = vpop.f32.mrb[0].mxu0
    %v886 = vadd.f32 0.0, %v885
    %v887 = vpop.f32.mrb[0].mxu0
    %888 = vdwg.mxu0
    %890 = vrot.lane.b32.xlu0 %v886, 24
    %v891 = vpop.permute.xlu0 %890
    %vm893 = vcmask 261312
    %894 = vst.msk [vmem:[#allocation2] sm:$0xff] %vm893, %v891
    %v895 = vmul.f32 %v204, 0.35355338
    %s896 = scalar_lea.vmem %s1, 32
    %v897 = vld [vmem:[%s896] sm:$0xff]
    %899 = vrot.lane.b32.xlu0 %v204, 96
    %v900 = vpop.permute.xlu0 %899
    %v902 = vsel %vm212, %v895, 0
    %v904 = vsel %vm212, %v900, 0
    %906 = vmatprep.subr.mxu0 0.0
    %907 = vmatpush1.xpose.msra.mxu0 %v904
    %908 = vmatprep.subr.mxu0 0.0
    %909 = vmatpush1.xpose.msra.mxu0 0.0
    %910 = vmatprep.subr.mxu0 0.0
    %911 = vmatpush1.xpose.msra.mxu0 0.0
    %912 = vmatprep.subr.mxu0 0.0
    %913 = vmatpush1.xpose.msra.mxu0 0.0
    %914 = vmatprep.subr.mxu0 0.0
    %915 = vmatpush1.xpose.msra.mxu0 0.0
    %916 = vmatprep.subr.mxu0 0.0
    %917 = vmatpush1.xpose.msra.mxu0 0.0
    %918 = vmatprep.subr.mxu0 0.0
    %919 = vmatpush1.xpose.msra.mxu0 0.0
    %920 = vmatprep.subr.mxu0 0.0
    %921 = vmatpush1.xpose.msra.mxu0 0.0
    %922 = vmatprep.subr.mxu0 0.0
    %923 = vmatpush1.xpose.msra.mxu0 0.0
    %924 = vmatprep.subr.mxu0 0.0
    %925 = vmatpush1.xpose.msra.mxu0 0.0
    %926 = vmatprep.subr.mxu0 0.0
    %927 = vmatpush1.xpose.msra.mxu0 0.0
    %928 = vmatprep.subr.mxu0 0.0
    %929 = vmatpush1.xpose.msra.mxu0 0.0
    %930 = vmatprep.subr.mxu0 0.0
    %931 = vmatpush1.xpose.msra.mxu0 0.0
    %932 = vmatprep.subr.mxu0 0.0
    %933 = vmatpush1.xpose.msra.mxu0 0.0
    %934 = vmatprep.subr.mxu0 0.0
    %935 = vmatpush1.xpose.msra.mxu0 0.0
    %936 = vmatprep.subr.mxu0 0.0
    %937 = vmatpush1.xpose.msra.mxu0 0.0
    %938 = vmatprep.subr.mxu0 0.0
    %939 = vmatpush1.xpose.msra.mxu0 0.0
    %940 = vmatprep.subr.mxu0 0.0
    %941 = vmatpush1.xpose.msra.mxu0 0.0
    %942 = vmatprep.subr.mxu0 0.0
    %943 = vmatpush1.xpose.msra.mxu0 0.0
    %944 = vmatprep.subr.mxu0 0.0
    %945 = vmatpush1.xpose.msra.mxu0 0.0
    %946 = vmatprep.subr.mxu0 0.0
    %947 = vmatpush1.xpose.msra.mxu0 0.0
    %948 = vmatprep.subr.mxu0 0.0
    %949 = vmatpush1.xpose.msra.mxu0 0.0
    %950 = vmatprep.subr.mxu0 0.0
    %951 = vmatpush1.xpose.msra.mxu0 0.0
    %952 = vmatprep.subr.mxu0 0.0
    %953 = vmatpush1.xpose.msra.mxu0 0.0
    %954 = vmatprep.subr.mxu0 0.0
    %955 = vmatpush1.xpose.msra.mxu0 0.0
    %956 = vmatprep.subr.mxu0 0.0
    %957 = vmatpush1.xpose.msra.mxu0 0.0
    %958 = vmatprep.subr.mxu0 0.0
    %959 = vmatpush1.xpose.msra.mxu0 0.0
    %960 = vmatprep.subr.mxu0 0.0
    %961 = vmatpush1.xpose.msra.mxu0 0.0
    %962 = vmatprep.subr.mxu0 0.0
    %963 = vmatpush1.xpose.msra.mxu0 0.0
    %964 = vmatprep.subr.mxu0 0.0
    %965 = vmatpush1.xpose.msra.mxu0 0.0
    %966 = vmatprep.subr.mxu0 0.0
    %967 = vmatpush1.xpose.msra.mxu0 0.0
    %968 = vmatprep.subr.mxu0 0.0
    %969 = vmatpush1.xpose.msra.mxu0 0.0
    %970 = vmatprep.mubr.f32.mxu0 0.0
    %971 = vmatmul.mubr.f32.gmra.mrb[0].mxu0 %v902
    %v972 = vpop.f32.mrb[0].mxu0
    %v973 = vadd.f32 %v897, %v972
    %v974 = vpop.f32.mrb[0].mxu0
    %975 = vdwg.mxu0
    %v976 = vsel %vm212, %v973, -inf
    %977 = vmax.xlane.f32.xlu0 %v976
    %v978 = vpop.xlane.xlu0 %977
    %v979 = vsub.f32 %v973, %v978
    %v980 = vmul.f32 %v979, 1.442695
    %v981 = vpow.pop %v980
    %v982 = vsel %vm212, %v981, 0.0
    %983 = vadd.xlane.f32.xlu0 %v982
    %v984 = vpop.xlane.xlu0 %983
    %v985 = vrcp.pop %v984
    %v986 = vmul.f32 %v981, %v985
    %987 = vrot.lane.b32.xlu0 %v204, 64
    %v988 = vpop.permute.xlu0 %987
    %v991 = vsel %vm212, %v986, 0
    %993 = vmatprep.subr.mxu0 0.0
    %994 = vmatpush1.msra.mxu0 %v988
    %995 = vmatprep.subr.mxu0 0.0
    %996 = vmatpush1.msra.mxu0 0.0
    %997 = vmatprep.subr.mxu0 0.0
    %998 = vmatpush1.msra.mxu0 0.0
    %999 = vmatprep.subr.mxu0 0.0
    %1000 = vmatpush1.msra.mxu0 0.0
    %1001 = vmatprep.subr.mxu0 0.0
    %1002 = vmatpush1.msra.mxu0 0.0
    %1003 = vmatprep.subr.mxu0 0.0
    %1004 = vmatpush1.msra.mxu0 0.0
    %1005 = vmatprep.subr.mxu0 0.0
    %1006 = vmatpush1.msra.mxu0 0.0
    %1007 = vmatprep.subr.mxu0 0.0
    %1008 = vmatpush1.msra.mxu0 0.0
    %1009 = vmatprep.subr.mxu0 0.0
    %1010 = vmatpush1.msra.mxu0 0.0
    %1011 = vmatprep.subr.mxu0 0.0
    %1012 = vmatpush1.msra.mxu0 0.0
    %1013 = vmatprep.subr.mxu0 0.0
    %1014 = vmatpush1.msra.mxu0 0.0
    %1015 = vmatprep.subr.mxu0 0.0
    %1016 = vmatpush1.msra.mxu0 0.0
    %1017 = vmatprep.subr.mxu0 0.0
    %1018 = vmatpush1.msra.mxu0 0.0
    %1019 = vmatprep.subr.mxu0 0.0
    %1020 = vmatpush1.msra.mxu0 0.0
    %1021 = vmatprep.subr.mxu0 0.0
    %1022 = vmatpush1.msra.mxu0 0.0
    %1023 = vmatprep.subr.mxu0 0.0
    %1024 = vmatpush1.msra.mxu0 0.0
    %1025 = vmatprep.subr.mxu0 0.0
    %1026 = vmatpush1.msra.mxu0 0.0
    %1027 = vmatprep.subr.mxu0 0.0
    %1028 = vmatpush1.msra.mxu0 0.0
    %1029 = vmatprep.subr.mxu0 0.0
    %1030 = vmatpush1.msra.mxu0 0.0
    %1031 = vmatprep.subr.mxu0 0.0
    %1032 = vmatpush1.msra.mxu0 0.0
    %1033 = vmatprep.subr.mxu0 0.0
    %1034 = vmatpush1.msra.mxu0 0.0
    %1035 = vmatprep.subr.mxu0 0.0
    %1036 = vmatpush1.msra.mxu0 0.0
    %1037 = vmatprep.subr.mxu0 0.0
    %1038 = vmatpush1.msra.mxu0 0.0
    %1039 = vmatprep.subr.mxu0 0.0
    %1040 = vmatpush1.msra.mxu0 0.0
    %1041 = vmatprep.subr.mxu0 0.0
    %1042 = vmatpush1.msra.mxu0 0.0
    %1043 = vmatprep.subr.mxu0 0.0
    %1044 = vmatpush1.msra.mxu0 0.0
    %1045 = vmatprep.subr.mxu0 0.0
    %1046 = vmatpush1.msra.mxu0 0.0
    %1047 = vmatprep.subr.mxu0 0.0
    %1048 = vmatpush1.msra.mxu0 0.0
    %1049 = vmatprep.subr.mxu0 0.0
    %1050 = vmatpush1.msra.mxu0 0.0
    %1051 = vmatprep.subr.mxu0 0.0
    %1052 = vmatpush1.msra.mxu0 0.0
    %1053 = vmatprep.subr.mxu0 0.0
    %1054 = vmatpush1.msra.mxu0 0.0
    %1055 = vmatprep.subr.mxu0 0.0
    %1056 = vmatpush1.msra.mxu0 0.0
    %1057 = vmatprep.mubr.f32.mxu0 0.0
    %1058 = vmatmul.mubr.f32.gmra.mrb[0].mxu0 %v991
    %v1059 = vpop.f32.mrb[0].mxu0
    %v1060 = vadd.f32 0.0, %v1059
    %v1061 = vpop.f32.mrb[0].mxu0
    %1062 = vdwg.mxu0
    %1063 = vst.msk [vmem:[#allocation2 + $0x8] sm:$0xff] %vm212, %v1060
    %s1064 = scalar_lea.vmem %s1, 40
    %v1065 = vld [vmem:[%s1064] sm:$0xff]
    %1066 = vrot.lane.b32.xlu0 %v895, 120
    %v1067 = vpop.permute.xlu0 %1066
    %1068 = vrot.lane.b32.xlu0 %v204, 88
    %v1069 = vpop.permute.xlu0 %1068
    %v1070 = vsel %vm212, %v1067, 0
    %v1072 = vsel %vm212, %v1069, 0
    %1074 = vmatprep.subr.mxu0 0.0
    %1075 = vmatpush1.xpose.msra.mxu0 %v1072
    %1076 = vmatprep.subr.mxu0 0.0
    %1077 = vmatpush1.xpose.msra.mxu0 0.0
    %1078 = vmatprep.subr.mxu0 0.0
    %1079 = vmatpush1.xpose.msra.mxu0 0.0
    %1080 = vmatprep.subr.mxu0 0.0
    %1081 = vmatpush1.xpose.msra.mxu0 0.0
    %1082 = vmatprep.subr.mxu0 0.0
    %1083 = vmatpush1.xpose.msra.mxu0 0.0
    %1084 = vmatprep.subr.mxu0 0.0
    %1085 = vmatpush1.xpose.msra.mxu0 0.0
    %1086 = vmatprep.subr.mxu0 0.0
    %1087 = vmatpush1.xpose.msra.mxu0 0.0
    %1088 = vmatprep.subr.mxu0 0.0
    %1089 = vmatpush1.xpose.msra.mxu0 0.0
    %1090 = vmatprep.subr.mxu0 0.0
    %1091 = vmatpush1.xpose.msra.mxu0 0.0
    %1092 = vmatprep.subr.mxu0 0.0
    %1093 = vmatpush1.xpose.msra.mxu0 0.0
    %1094 = vmatprep.subr.mxu0 0.0
    %1095 = vmatpush1.xpose.msra.mxu0 0.0
    %1096 = vmatprep.subr.mxu0 0.0
    %1097 = vmatpush1.xpose.msra.mxu0 0.0
    %1098 = vmatprep.subr.mxu0 0.0
    %1099 = vmatpush1.xpose.msra.mxu0 0.0
    %1100 = vmatprep.subr.mxu0 0.0
    %1101 = vmatpush1.xpose.msra.mxu0 0.0
    %1102 = vmatprep.subr.mxu0 0.0
    %1103 = vmatpush1.xpose.msra.mxu0 0.0
    %1104 = vmatprep.subr.mxu0 0.0
    %1105 = vmatpush1.xpose.msra.mxu0 0.0
    %1106 = vmatprep.subr.mxu0 0.0
    %1107 = vmatpush1.xpose.msra.mxu0 0.0
    %1108 = vmatprep.subr.mxu0 0.0
    %1109 = vmatpush1.xpose.msra.mxu0 0.0
    %1110 = vmatprep.subr.mxu0 0.0
    %1111 = vmatpush1.xpose.msra.mxu0 0.0
    %1112 = vmatprep.subr.mxu0 0.0
    %1113 = vmatpush1.xpose.msra.mxu0 0.0
    %1114 = vmatprep.subr.mxu0 0.0
    %1115 = vmatpush1.xpose.msra.mxu0 0.0
    %1116 = vmatprep.subr.mxu0 0.0
    %1117 = vmatpush1.xpose.msra.mxu0 0.0
    %1118 = vmatprep.subr.mxu0 0.0
    %1119 = vmatpush1.xpose.msra.mxu0 0.0
    %1120 = vmatprep.subr.mxu0 0.0
    %1121 = vmatpush1.xpose.msra.mxu0 0.0
    %1122 = vmatprep.subr.mxu0 0.0
    %1123 = vmatpush1.xpose.msra.mxu0 0.0
    %1124 = vmatprep.subr.mxu0 0.0
    %1125 = vmatpush1.xpose.msra.mxu0 0.0
    %1126 = vmatprep.subr.mxu0 0.0
    %1127 = vmatpush1.xpose.msra.mxu0 0.0
    %1128 = vmatprep.subr.mxu0 0.0
    %1129 = vmatpush1.xpose.msra.mxu0 0.0
    %1130 = vmatprep.subr.mxu0 0.0
    %1131 = vmatpush1.xpose.msra.mxu0 0.0
    %1132 = vmatprep.subr.mxu0 0.0
    %1133 = vmatpush1.xpose.msra.mxu0 0.0
    %1134 = vmatprep.subr.mxu0 0.0
    %1135 = vmatpush1.xpose.msra.mxu0 0.0
    %1136 = vmatprep.subr.mxu0 0.0
    %1137 = vmatpush1.xpose.msra.mxu0 0.0
    %1138 = vmatprep.mubr.f32.mxu0 0.0
    %1139 = vmatmul.mubr.f32.gmra.mrb[0].mxu0 %v1070
    %v1140 = vpop.f32.mrb[0].mxu0
    %v1141 = vadd.f32 %v1065, %v1140
    %v1142 = vpop.f32.mrb[0].mxu0
    %1143 = vdwg.mxu0
    %v1144 = vsel %vm212, %v1141, -inf
    %1145 = vmax.xlane.f32.xlu0 %v1144
    %v1146 = vpop.xlane.xlu0 %1145
    %v1147 = vsub.f32 %v1141, %v1146
    %v1148 = vmul.f32 %v1147, 1.442695
    %v1149 = vpow.pop %v1148
    %v1150 = vsel %vm212, %v1149, 0.0
    %1151 = vadd.xlane.f32.xlu0 %v1150
    %v1152 = vpop.xlane.xlu0 %1151
    %v1153 = vrcp.pop %v1152
    %v1154 = vmul.f32 %v1149, %v1153
    %1155 = vrot.lane.b32.xlu0 %v204, 56
    %v1156 = vpop.permute.xlu0 %1155
    %v1159 = vsel %vm212, %v1154, 0
    %1161 = vmatprep.subr.mxu0 0.0
    %1162 = vmatpush1.msra.mxu0 %v1156
    %1163 = vmatprep.subr.mxu0 0.0
    %1164 = vmatpush1.msra.mxu0 0.0
    %1165 = vmatprep.subr.mxu0 0.0
    %1166 = vmatpush1.msra.mxu0 0.0
    %1167 = vmatprep.subr.mxu0 0.0
    %1168 = vmatpush1.msra.mxu0 0.0
    %1169 = vmatprep.subr.mxu0 0.0
    %1170 = vmatpush1.msra.mxu0 0.0
    %1171 = vmatprep.subr.mxu0 0.0
    %1172 = vmatpush1.msra.mxu0 0.0
    %1173 = vmatprep.subr.mxu0 0.0
    %1174 = vmatpush1.msra.mxu0 0.0
    %1175 = vmatprep.subr.mxu0 0.0
    %1176 = vmatpush1.msra.mxu0 0.0
    %1177 = vmatprep.subr.mxu0 0.0
    %1178 = vmatpush1.msra.mxu0 0.0
    %1179 = vmatprep.subr.mxu0 0.0
    %1180 = vmatpush1.msra.mxu0 0.0
    %1181 = vmatprep.subr.mxu0 0.0
    %1182 = vmatpush1.msra.mxu0 0.0
    %1183 = vmatprep.subr.mxu0 0.0
    %1184 = vmatpush1.msra.mxu0 0.0
    %1185 = vmatprep.subr.mxu0 0.0
    %1186 = vmatpush1.msra.mxu0 0.0
    %1187 = vmatprep.subr.mxu0 0.0
    %1188 = vmatpush1.msra.mxu0 0.0
    %1189 = vmatprep.subr.mxu0 0.0
    %1190 = vmatpush1.msra.mxu0 0.0
    %1191 = vmatprep.subr.mxu0 0.0
    %1192 = vmatpush1.msra.mxu0 0.0
    %1193 = vmatprep.subr.mxu0 0.0
    %1194 = vmatpush1.msra.mxu0 0.0
    %1195 = vmatprep.subr.mxu0 0.0
    %1196 = vmatpush1.msra.mxu0 0.0
    %1197 = vmatprep.subr.mxu0 0.0
    %1198 = vmatpush1.msra.mxu0 0.0
    %1199 = vmatprep.subr.mxu0 0.0
    %1200 = vmatpush1.msra.mxu0 0.0
    %1201 = vmatprep.subr.mxu0 0.0
    %1202 = vmatpush1.msra.mxu0 0.0
    %1203 = vmatprep.subr.mxu0 0.0
    %1204 = vmatpush1.msra.mxu0 0.0
    %1205 = vmatprep.subr.mxu0 0.0
    %1206 = vmatpush1.msra.mxu0 0.0
    %1207 = vmatprep.subr.mxu0 0.0
    %1208 = vmatpush1.msra.mxu0 0.0
    %1209 = vmatprep.subr.mxu0 0.0
    %1210 = vmatpush1.msra.mxu0 0.0
    %1211 = vmatprep.subr.mxu0 0.0
    %1212 = vmatpush1.msra.mxu0 0.0
    %1213 = vmatprep.subr.mxu0 0.0
    %1214 = vmatpush1.msra.mxu0 0.0
    %1215 = vmatprep.subr.mxu0 0.0
    %1216 = vmatpush1.msra.mxu0 0.0
    %1217 = vmatprep.subr.mxu0 0.0
    %1218 = vmatpush1.msra.mxu0 0.0
    %1219 = vmatprep.subr.mxu0 0.0
    %1220 = vmatpush1.msra.mxu0 0.0
    %1221 = vmatprep.subr.mxu0 0.0
    %1222 = vmatpush1.msra.mxu0 0.0
    %1223 = vmatprep.subr.mxu0 0.0
    %1224 = vmatpush1.msra.mxu0 0.0
    %1225 = vmatprep.mubr.f32.mxu0 0.0
    %1226 = vmatmul.mubr.f32.gmra.mrb[0].mxu0 %v1159
    %v1227 = vpop.f32.mrb[0].mxu0
    %v1228 = vadd.f32 0.0, %v1227
    %v1229 = vpop.f32.mrb[0].mxu0
    %1230 = vdwg.mxu0
    %1232 = vrot.lane.b32.xlu0 %v1228, 8
    %v1233 = vpop.permute.xlu0 %1232
    %1235 = vst.msk [vmem:[#allocation2 + $0x8] sm:$0xff] %vm547, %v1233
    %s1236 = scalar_lea.vmem %s1, 48
    %v1237 = vld [vmem:[%s1236] sm:$0xff]
    %1238 = vrot.lane.b32.xlu0 %v895, 112
    %v1239 = vpop.permute.xlu0 %1238
    %1240 = vrot.lane.b32.xlu0 %v204, 80
    %v1241 = vpop.permute.xlu0 %1240
    %v1242 = vsel %vm212, %v1239, 0
    %v1244 = vsel %vm212, %v1241, 0
    %1246 = vmatprep.subr.mxu0 0.0
    %1247 = vmatpush1.xpose.msra.mxu0 %v1244
    %1248 = vmatprep.subr.mxu0 0.0
    %1249 = vmatpush1.xpose.msra.mxu0 0.0
    %1250 = vmatprep.subr.mxu0 0.0
    %1251 = vmatpush1.xpose.msra.mxu0 0.0
    %1252 = vmatprep.subr.mxu0 0.0
    %1253 = vmatpush1.xpose.msra.mxu0 0.0
    %1254 = vmatprep.subr.mxu0 0.0
    %1255 = vmatpush1.xpose.msra.mxu0 0.0
    %1256 = vmatprep.subr.mxu0 0.0
    %1257 = vmatpush1.xpose.msra.mxu0 0.0
    %1258 = vmatprep.subr.mxu0 0.0
    %1259 = vmatpush1.xpose.msra.mxu0 0.0
    %1260 = vmatprep.subr.mxu0 0.0
    %1261 = vmatpush1.xpose.msra.mxu0 0.0
    %1262 = vmatprep.subr.mxu0 0.0
    %1263 = vmatpush1.xpose.msra.mxu0 0.0
    %1264 = vmatprep.subr.mxu0 0.0
    %1265 = vmatpush1.xpose.msra.mxu0 0.0
    %1266 = vmatprep.subr.mxu0 0.0
    %1267 = vmatpush1.xpose.msra.mxu0 0.0
    %1268 = vmatprep.subr.mxu0 0.0
    %1269 = vmatpush1.xpose.msra.mxu0 0.0
    %1270 = vmatprep.subr.mxu0 0.0
    %1271 = vmatpush1.xpose.msra.mxu0 0.0
    %1272 = vmatprep.subr.mxu0 0.0
    %1273 = vmatpush1.xpose.msra.mxu0 0.0
    %1274 = vmatprep.subr.mxu0 0.0
    %1275 = vmatpush1.xpose.msra.mxu0 0.0
    %1276 = vmatprep.subr.mxu0 0.0
    %1277 = vmatpush1.xpose.msra.mxu0 0.0
    %1278 = vmatprep.subr.mxu0 0.0
    %1279 = vmatpush1.xpose.msra.mxu0 0.0
    %1280 = vmatprep.subr.mxu0 0.0
    %1281 = vmatpush1.xpose.msra.mxu0 0.0
    %1282 = vmatprep.subr.mxu0 0.0
    %1283 = vmatpush1.xpose.msra.mxu0 0.0
    %1284 = vmatprep.subr.mxu0 0.0
    %1285 = vmatpush1.xpose.msra.mxu0 0.0
    %1286 = vmatprep.subr.mxu0 0.0
    %1287 = vmatpush1.xpose.msra.mxu0 0.0
    %1288 = vmatprep.subr.mxu0 0.0
    %1289 = vmatpush1.xpose.msra.mxu0 0.0
    %1290 = vmatprep.subr.mxu0 0.0
    %1291 = vmatpush1.xpose.msra.mxu0 0.0
    %1292 = vmatprep.subr.mxu0 0.0
    %1293 = vmatpush1.xpose.msra.mxu0 0.0
    %1294 = vmatprep.subr.mxu0 0.0
    %1295 = vmatpush1.xpose.msra.mxu0 0.0
    %1296 = vmatprep.subr.mxu0 0.0
    %1297 = vmatpush1.xpose.msra.mxu0 0.0
    %1298 = vmatprep.subr.mxu0 0.0
    %1299 = vmatpush1.xpose.msra.mxu0 0.0
    %1300 = vmatprep.subr.mxu0 0.0
    %1301 = vmatpush1.xpose.msra.mxu0 0.0
    %1302 = vmatprep.subr.mxu0 0.0
    %1303 = vmatpush1.xpose.msra.mxu0 0.0
    %1304 = vmatprep.subr.mxu0 0.0
    %1305 = vmatpush1.xpose.msra.mxu0 0.0
    %1306 = vmatprep.subr.mxu0 0.0
    %1307 = vmatpush1.xpose.msra.mxu0 0.0
    %1308 = vmatprep.subr.mxu0 0.0
    %1309 = vmatpush1.xpose.msra.mxu0 0.0
    %1310 = vmatprep.mubr.f32.mxu0 0.0
    %1311 = vmatmul.mubr.f32.gmra.mrb[0].mxu0 %v1242
    %v1312 = vpop.f32.mrb[0].mxu0
    %v1313 = vadd.f32 %v1237, %v1312
    %v1314 = vpop.f32.mrb[0].mxu0
    %1315 = vdwg.mxu0
    %v1316 = vsel %vm212, %v1313, -inf
    %1317 = vmax.xlane.f32.xlu0 %v1316
    %v1318 = vpop.xlane.xlu0 %1317
    %v1319 = vsub.f32 %v1313, %v1318
    %v1320 = vmul.f32 %v1319, 1.442695
    %v1321 = vpow.pop %v1320
    %v1322 = vsel %vm212, %v1321, 0.0
    %1323 = vadd.xlane.f32.xlu0 %v1322
    %v1324 = vpop.xlane.xlu0 %1323
    %v1325 = vrcp.pop %v1324
    %v1326 = vmul.f32 %v1321, %v1325
    %1327 = vrot.lane.b32.xlu0 %v204, 48
    %v1328 = vpop.permute.xlu0 %1327
    %v1331 = vsel %vm212, %v1326, 0
    %1333 = vmatprep.subr.mxu0 0.0
    %1334 = vmatpush1.msra.mxu0 %v1328
    %1335 = vmatprep.subr.mxu0 0.0
    %1336 = vmatpush1.msra.mxu0 0.0
    %1337 = vmatprep.subr.mxu0 0.0
    %1338 = vmatpush1.msra.mxu0 0.0
    %1339 = vmatprep.subr.mxu0 0.0
    %1340 = vmatpush1.msra.mxu0 0.0
    %1341 = vmatprep.subr.mxu0 0.0
    %1342 = vmatpush1.msra.mxu0 0.0
    %1343 = vmatprep.subr.mxu0 0.0
    %1344 = vmatpush1.msra.mxu0 0.0
    %1345 = vmatprep.subr.mxu0 0.0
    %1346 = vmatpush1.msra.mxu0 0.0
    %1347 = vmatprep.subr.mxu0 0.0
    %1348 = vmatpush1.msra.mxu0 0.0
    %1349 = vmatprep.subr.mxu0 0.0
    %1350 = vmatpush1.msra.mxu0 0.0
    %1351 = vmatprep.subr.mxu0 0.0
    %1352 = vmatpush1.msra.mxu0 0.0
    %1353 = vmatprep.subr.mxu0 0.0
    %1354 = vmatpush1.msra.mxu0 0.0
    %1355 = vmatprep.subr.mxu0 0.0
    %1356 = vmatpush1.msra.mxu0 0.0
    %1357 = vmatprep.subr.mxu0 0.0
    %1358 = vmatpush1.msra.mxu0 0.0
    %1359 = vmatprep.subr.mxu0 0.0
    %1360 = vmatpush1.msra.mxu0 0.0
    %1361 = vmatprep.subr.mxu0 0.0
    %1362 = vmatpush1.msra.mxu0 0.0
    %1363 = vmatprep.subr.mxu0 0.0
    %1364 = vmatpush1.msra.mxu0 0.0
    %1365 = vmatprep.subr.mxu0 0.0
    %1366 = vmatpush1.msra.mxu0 0.0
    %1367 = vmatprep.subr.mxu0 0.0
    %1368 = vmatpush1.msra.mxu0 0.0
    %1369 = vmatprep.subr.mxu0 0.0
    %1370 = vmatpush1.msra.mxu0 0.0
    %1371 = vmatprep.subr.mxu0 0.0
    %1372 = vmatpush1.msra.mxu0 0.0
    %1373 = vmatprep.subr.mxu0 0.0
    %1374 = vmatpush1.msra.mxu0 0.0
    %1375 = vmatprep.subr.mxu0 0.0
    %1376 = vmatpush1.msra.mxu0 0.0
    %1377 = vmatprep.subr.mxu0 0.0
    %1378 = vmatpush1.msra.mxu0 0.0
    %1379 = vmatprep.subr.mxu0 0.0
    %1380 = vmatpush1.msra.mxu0 0.0
    %1381 = vmatprep.subr.mxu0 0.0
    %1382 = vmatpush1.msra.mxu0 0.0
    %1383 = vmatprep.subr.mxu0 0.0
    %1384 = vmatpush1.msra.mxu0 0.0
    %1385 = vmatprep.subr.mxu0 0.0
    %1386 = vmatpush1.msra.mxu0 0.0
    %1387 = vmatprep.subr.mxu0 0.0
    %1388 = vmatpush1.msra.mxu0 0.0
    %1389 = vmatprep.subr.mxu0 0.0
    %1390 = vmatpush1.msra.mxu0 0.0
    %1391 = vmatprep.subr.mxu0 0.0
    %1392 = vmatpush1.msra.mxu0 0.0
    %1393 = vmatprep.subr.mxu0 0.0
    %1394 = vmatpush1.msra.mxu0 0.0
    %1395 = vmatprep.subr.mxu0 0.0
    %1396 = vmatpush1.msra.mxu0 0.0
    %1397 = vmatprep.mubr.f32.mxu0 0.0
    %1398 = vmatmul.mubr.f32.gmra.mrb[0].mxu0 %v1331
    %v1399 = vpop.f32.mrb[0].mxu0
    %v1400 = vadd.f32 0.0, %v1399
    %v1401 = vpop.f32.mrb[0].mxu0
    %1402 = vdwg.mxu0
    %1404 = vrot.lane.b32.xlu0 %v1400, 16
    %v1405 = vpop.permute.xlu0 %1404
    %1407 = vst.msk [vmem:[#allocation2 + $0x8] sm:$0xff] %vm720, %v1405
    %s1408 = scalar_lea.vmem %s1, 56
    %v1409 = vld [vmem:[%s1408] sm:$0xff]
    %1410 = vrot.lane.b32.xlu0 %v895, 104
    %v1411 = vpop.permute.xlu0 %1410
    %1412 = vrot.lane.b32.xlu0 %v204, 72
    %v1413 = vpop.permute.xlu0 %1412
    %v1414 = vsel %vm212, %v1411, 0
    %v1416 = vsel %vm212, %v1413, 0
    %1418 = vmatprep.subr.mxu0 0.0
    %1419 = vmatpush1.xpose.msra.mxu0 %v1416
    %1420 = vmatprep.subr.mxu0 0.0
    %1421 = vmatpush1.xpose.msra.mxu0 0.0
    %1422 = vmatprep.subr.mxu0 0.0
    %1423 = vmatpush1.xpose.msra.mxu0 0.0
    %1424 = vmatprep.subr.mxu0 0.0
    %1425 = vmatpush1.xpose.msra.mxu0 0.0
    %1426 = vmatprep.subr.mxu0 0.0
    %1427 = vmatpush1.xpose.msra.mxu0 0.0
    %1428 = vmatprep.subr.mxu0 0.0
    %1429 = vmatpush1.xpose.msra.mxu0 0.0
    %1430 = vmatprep.subr.mxu0 0.0
    %1431 = vmatpush1.xpose.msra.mxu0 0.0
    %1432 = vmatprep.subr.mxu0 0.0
    %1433 = vmatpush1.xpose.msra.mxu0 0.0
    %1434 = vmatprep.subr.mxu0 0.0
    %1435 = vmatpush1.xpose.msra.mxu0 0.0
    %1436 = vmatprep.subr.mxu0 0.0
    %1437 = vmatpush1.xpose.msra.mxu0 0.0
    %1438 = vmatprep.subr.mxu0 0.0
    %1439 = vmatpush1.xpose.msra.mxu0 0.0
    %1440 = vmatprep.subr.mxu0 0.0
    %1441 = vmatpush1.xpose.msra.mxu0 0.0
    %1442 = vmatprep.subr.mxu0 0.0
    %1443 = vmatpush1.xpose.msra.mxu0 0.0
    %1444 = vmatprep.subr.mxu0 0.0
    %1445 = vmatpush1.xpose.msra.mxu0 0.0
    %1446 = vmatprep.subr.mxu0 0.0
    %1447 = vmatpush1.xpose.msra.mxu0 0.0
    %1448 = vmatprep.subr.mxu0 0.0
    %1449 = vmatpush1.xpose.msra.mxu0 0.0
    %1450 = vmatprep.subr.mxu0 0.0
    %1451 = vmatpush1.xpose.msra.mxu0 0.0
    %1452 = vmatprep.subr.mxu0 0.0
    %1453 = vmatpush1.xpose.msra.mxu0 0.0
    %1454 = vmatprep.subr.mxu0 0.0
    %1455 = vmatpush1.xpose.msra.mxu0 0.0
    %1456 = vmatprep.subr.mxu0 0.0
    %1457 = vmatpush1.xpose.msra.mxu0 0.0
    %1458 = vmatprep.subr.mxu0 0.0
    %1459 = vmatpush1.xpose.msra.mxu0 0.0
    %1460 = vmatprep.subr.mxu0 0.0
    %1461 = vmatpush1.xpose.msra.mxu0 0.0
    %1462 = vmatprep.subr.mxu0 0.0
    %1463 = vmatpush1.xpose.msra.mxu0 0.0
    %1464 = vmatprep.subr.mxu0 0.0
    %1465 = vmatpush1.xpose.msra.mxu0 0.0
    %1466 = vmatprep.subr.mxu0 0.0
    %1467 = vmatpush1.xpose.msra.mxu0 0.0
    %1468 = vmatprep.subr.mxu0 0.0
    %1469 = vmatpush1.xpose.msra.mxu0 0.0
    %1470 = vmatprep.subr.mxu0 0.0
    %1471 = vmatpush1.xpose.msra.mxu0 0.0
    %1472 = vmatprep.subr.mxu0 0.0
    %1473 = vmatpush1.xpose.msra.mxu0 0.0
    %1474 = vmatprep.subr.mxu0 0.0
    %1475 = vmatpush1.xpose.msra.mxu0 0.0
    %1476 = vmatprep.subr.mxu0 0.0
    %1477 = vmatpush1.xpose.msra.mxu0 0.0
    %1478 = vmatprep.subr.mxu0 0.0
    %1479 = vmatpush1.xpose.msra.mxu0 0.0
    %1480 = vmatprep.subr.mxu0 0.0
    %1481 = vmatpush1.xpose.msra.mxu0 0.0
    %1482 = vmatprep.mubr.f32.mxu0 0.0
    %1483 = vmatmul.mubr.f32.gmra.mrb[0].mxu0 %v1414
    %v1484 = vpop.f32.mrb[0].mxu0
    %v1485 = vadd.f32 %v1409, %v1484
    %v1486 = vpop.f32.mrb[0].mxu0
    %1487 = vdwg.mxu0
    %v1488 = vsel %vm212, %v1485, -inf
    %1489 = vmax.xlane.f32.xlu0 %v1488
    %v1490 = vpop.xlane.xlu0 %1489
    %v1491 = vsub.f32 %v1485, %v1490
    %v1492 = vmul.f32 %v1491, 1.442695
    %v1493 = vpow.pop %v1492
    %v1494 = vsel %vm212, %v1493, 0.0
    %1495 = vadd.xlane.f32.xlu0 %v1494
    %v1496 = vpop.xlane.xlu0 %1495
    %v1497 = vrcp.pop %v1496
    %v1498 = vmul.f32 %v1493, %v1497
    %1499 = vrot.lane.b32.xlu0 %v204, 40
    %v1500 = vpop.permute.xlu0 %1499
    %v1503 = vsel %vm212, %v1498, 0
    %1505 = vmatprep.subr.mxu0 0.0
    %1506 = vmatpush1.msra.mxu0 %v1500
    %1507 = vmatprep.subr.mxu0 0.0
    %1508 = vmatpush1.msra.mxu0 0.0
    %1509 = vmatprep.subr.mxu0 0.0
    %1510 = vmatpush1.msra.mxu0 0.0
    %1511 = vmatprep.subr.mxu0 0.0
    %1512 = vmatpush1.msra.mxu0 0.0
    %1513 = vmatprep.subr.mxu0 0.0
    %1514 = vmatpush1.msra.mxu0 0.0
    %1515 = vmatprep.subr.mxu0 0.0
    %1516 = vmatpush1.msra.mxu0 0.0
    %1517 = vmatprep.subr.mxu0 0.0
    %1518 = vmatpush1.msra.mxu0 0.0
    %1519 = vmatprep.subr.mxu0 0.0
    %1520 = vmatpush1.msra.mxu0 0.0
    %1521 = vmatprep.subr.mxu0 0.0
    %1522 = vmatpush1.msra.mxu0 0.0
    %1523 = vmatprep.subr.mxu0 0.0
    %1524 = vmatpush1.msra.mxu0 0.0
    %1525 = vmatprep.subr.mxu0 0.0
    %1526 = vmatpush1.msra.mxu0 0.0
    %1527 = vmatprep.subr.mxu0 0.0
    %1528 = vmatpush1.msra.mxu0 0.0
    %1529 = vmatprep.subr.mxu0 0.0
    %1530 = vmatpush1.msra.mxu0 0.0
    %1531 = vmatprep.subr.mxu0 0.0
    %1532 = vmatpush1.msra.mxu0 0.0
    %1533 = vmatprep.subr.mxu0 0.0
    %1534 = vmatpush1.msra.mxu0 0.0
    %1535 = vmatprep.subr.mxu0 0.0
    %1536 = vmatpush1.msra.mxu0 0.0
    %1537 = vmatprep.subr.mxu0 0.0
    %1538 = vmatpush1.msra.mxu0 0.0
    %1539 = vmatprep.subr.mxu0 0.0
    %1540 = vmatpush1.msra.mxu0 0.0
    %1541 = vmatprep.subr.mxu0 0.0
    %1542 = vmatpush1.msra.mxu0 0.0
    %1543 = vmatprep.subr.mxu0 0.0
    %1544 = vmatpush1.msra.mxu0 0.0
    %1545 = vmatprep.subr.mxu0 0.0
    %1546 = vmatpush1.msra.mxu0 0.0
    %1547 = vmatprep.subr.mxu0 0.0
    %1548 = vmatpush1.msra.mxu0 0.0
    %1549 = vmatprep.subr.mxu0 0.0
    %1550 = vmatpush1.msra.mxu0 0.0
    %1551 = vmatprep.subr.mxu0 0.0
    %1552 = vmatpush1.msra.mxu0 0.0
    %1553 = vmatprep.subr.mxu0 0.0
    %1554 = vmatpush1.msra.mxu0 0.0
    %1555 = vmatprep.subr.mxu0 0.0
    %1556 = vmatpush1.msra.mxu0 0.0
    %1557 = vmatprep.subr.mxu0 0.0
    %1558 = vmatpush1.msra.mxu0 0.0
    %1559 = vmatprep.subr.mxu0 0.0
    %1560 = vmatpush1.msra.mxu0 0.0
    %1561 = vmatprep.subr.mxu0 0.0
    %1562 = vmatpush1.msra.mxu0 0.0
    %1563 = vmatprep.subr.mxu0 0.0
    %1564 = vmatpush1.msra.mxu0 0.0
    %1565 = vmatprep.subr.mxu0 0.0
    %1566 = vmatpush1.msra.mxu0 0.0
    %1567 = vmatprep.subr.mxu0 0.0
    %1568 = vmatpush1.msra.mxu0 0.0
    %1569 = vmatprep.mubr.f32.mxu0 0.0
    %1570 = vmatmul.mubr.f32.gmra.mrb[0].mxu0 %v1503
    %v1571 = vpop.f32.mrb[0].mxu0
    %v1572 = vadd.f32 0.0, %v1571
    %v1573 = vpop.f32.mrb[0].mxu0
    %1574 = vdwg.mxu0
    %1576 = vrot.lane.b32.xlu0 %v1572, 24
    %v1577 = vpop.permute.xlu0 %1576
    %1579 = vst.msk [vmem:[#allocation2 + $0x8] sm:$0xff] %vm893, %v1577
    %v1580 = vld [vmem:[#allocation2] sm:$0xff]
    %v1581 = vld [vmem:[#allocation2 + $0x8] sm:$0xff]
    %v1582 = vld [vmem:[#allocation6] sm:$0xff]
    %v1583 = vld [vmem:[#allocation6 + $0x8] sm:$0xff]
    %v1584 = vld [vmem:[#allocation6 + $0x10] sm:$0xff]
    %v1585 = vld [vmem:[#allocation6 + $0x18] sm:$0xff]
    %v1586 = vlaneseq
    %v1587 = vshrl.u32 %v1586, 7
    %v1588 = vsub.s32 0, %v1587
    %v1589 = vrot.slane %v73, %v1588
    %v1591 = vsel %vm78, %v1580, 0
    %v1594 = vsel %vm78, %v1581, 0
    %1596 = vmatprep.subr.mxu0 0.0
    %1597 = vmatpush1.msra.mxu0 %v1582
    %1598 = vmatprep.subr.mxu0 0.0
    %1599 = vmatpush1.msra.mxu0 %v1583
    %1600 = vmatprep.subr.mxu0 0.0
    %1601 = vmatpush1.msra.mxu0 %v1584
    %1602 = vmatprep.subr.mxu0 0.0
    %1603 = vmatpush1.msra.mxu0 %v1585
    %1604 = vmatprep.subr.mxu0 0.0
    %1605 = vmatpush1.msra.mxu0 0.0
    %1606 = vmatprep.subr.mxu0 0.0
    %1607 = vmatpush1.msra.mxu0 0.0
    %1608 = vmatprep.subr.mxu0 0.0
    %1609 = vmatpush1.msra.mxu0 0.0
    %1610 = vmatprep.subr.mxu0 0.0
    %1611 = vmatpush1.msra.mxu0 0.0
    %1612 = vmatprep.subr.mxu0 0.0
    %1613 = vmatpush1.msra.mxu0 0.0
    %1614 = vmatprep.subr.mxu0 0.0
    %1615 = vmatpush1.msra.mxu0 0.0
    %1616 = vmatprep.subr.mxu0 0.0
    %1617 = vmatpush1.msra.mxu0 0.0
    %1618 = vmatprep.subr.mxu0 0.0
    %1619 = vmatpush1.msra.mxu0 0.0
    %1620 = vmatprep.subr.mxu0 0.0
    %1621 = vmatpush1.msra.mxu0 0.0
    %1622 = vmatprep.subr.mxu0 0.0
    %1623 = vmatpush1.msra.mxu0 0.0
    %1624 = vmatprep.subr.mxu0 0.0
    %1625 = vmatpush1.msra.mxu0 0.0
    %1626 = vmatprep.subr.mxu0 0.0
    %1627 = vmatpush1.msra.mxu0 0.0
    %1628 = vmatprep.subr.mxu0 0.0
    %1629 = vmatpush1.msra.mxu0 0.0
    %1630 = vmatprep.subr.mxu0 0.0
    %1631 = vmatpush1.msra.mxu0 0.0
    %1632 = vmatprep.subr.mxu0 0.0
    %1633 = vmatpush1.msra.mxu0 0.0
    %1634 = vmatprep.subr.mxu0 0.0
    %1635 = vmatpush1.msra.mxu0 0.0
    %1636 = vmatprep.subr.mxu0 0.0
    %1637 = vmatpush1.msra.mxu0 0.0
    %1638 = vmatprep.subr.mxu0 0.0
    %1639 = vmatpush1.msra.mxu0 0.0
    %1640 = vmatprep.subr.mxu0 0.0
    %1641 = vmatpush1.msra.mxu0 0.0
    %1642 = vmatprep.subr.mxu0 0.0
    %1643 = vmatpush1.msra.mxu0 0.0
    %1644 = vmatprep.subr.mxu0 0.0
    %1645 = vmatpush1.msra.mxu0 0.0
    %1646 = vmatprep.subr.mxu0 0.0
    %1647 = vmatpush1.msra.mxu0 0.0
    %1648 = vmatprep.subr.mxu0 0.0
    %1649 = vmatpush1.msra.mxu0 0.0
    %1650 = vmatprep.subr.mxu0 0.0
    %1651 = vmatpush1.msra.mxu0 0.0
    %1652 = vmatprep.subr.mxu0 0.0
    %1653 = vmatpush1.msra.mxu0 0.0
    %1654 = vmatprep.subr.mxu0 0.0
    %1655 = vmatpush1.msra.mxu0 0.0
    %1656 = vmatprep.subr.mxu0 0.0
    %1657 = vmatpush1.msra.mxu0 0.0
    %1658 = vmatprep.subr.mxu0 0.0
    %1659 = vmatpush1.msra.mxu0 0.0
    %1660 = vmatprep.mubr.f32.mxu0 0.0
    %1661 = vmatmul.mubr.f32.gmra.mrb[0].mxu0 %v1591
    %v1662 = vpop.f32.mrb[0].mxu0
    %v1663 = vadd.f32 %v1589, %v1662
    %v1664 = vpop.f32.mrb[0].mxu0
    %1665 = vmatprep.mubr.f32.mxu0 0.0
    %1666 = vmatmul.mubr.f32.gmra.mrb[0].mxu0 %v1594
    %v1667 = vpop.f32.mrb[0].mxu0
    %v1668 = vadd.f32 %v1589, %v1667
    %v1669 = vpop.f32.mrb[0].mxu0
    %1670 = vdwg.mxu0
    %v1671 = vadd.f32 %v68, %v1663
    %v1672 = vadd.f32 %v69, %v1668
    %v1673 = vsel %vm78, %v1671, 0.0
    %1674 = vadd.xlane.f32.xlu0 %v1673
    %v1675 = vpop.xlane.xlu0 %1674
    %v1676 = vsel %vm78, %v1672, 0.0
    %1677 = vadd.xlane.f32.xlu0 %v1676
    %v1678 = vpop.xlane.xlu0 %1677
    %v1679 = vmul.f32 %v1675, %v85
    %v1680 = vmul.f32 %v1678, %v85
    %v1681 = vsub.f32 %v1671, %v1679
    %v1682 = vsub.f32 %v1672, %v1680
    %v1683 = vmul.f32 %v1681, %v1681
    %v1684 = vmul.f32 %v1682, %v1682
    %v1685 = vsel %vm78, %v1683, 0.0
    %1686 = vadd.xlane.f32.xlu0 %v1685
    %v1687 = vpop.xlane.xlu0 %1686
    %v1688 = vsel %vm78, %v1684, 0.0
    %1689 = vadd.xlane.f32.xlu0 %v1688
    %v1690 = vpop.xlane.xlu0 %1689
    %v1691 = vmul.f32 %v1687, %v85
    %v1692 = vmul.f32 %v1690, %v85
    %v1693 = vadd.f32 %v1691, 1e-05
    %v1694 = vadd.f32 %v1692, 1e-05
    %v1695 = vrsqrt.pop %v1693
    %v1696 = vrsqrt.pop %v1694
    %v1697 = vmul.f32 %v1681, %v1695
    %v1698 = vmul.f32 %v1682, %v1696
    %v1699 = vlaneseq
    %v1700 = vshrl.u32 %v1699, 7
    %v1701 = vsub.s32 0, %v1700
    %v1702 = vrot.slane %v74, %v1701
    %v1703 = vmul.f32 %v1697, %v1702
    %v1704 = vmul.f32 %v1698, %v1702
    %v1705 = vlaneseq
    %v1706 = vshrl.u32 %v1705, 7
    %v1707 = vsub.s32 0, %v1706
    %v1708 = vrot.slane %v75, %v1707
    %v1709 = vadd.f32 %v1703, %v1708
    %v1710 = vadd.f32 %v1704, %v1708
    %v1711 = vld [vmem:[#allocation8] sm:$0xff]
    %v1712 = vld [vmem:[#allocation8 + $0x8] sm:$0xff]
    %v1713 = vld [vmem:[#allocation8 + $0x10] sm:$0xff]
    %v1714 = vld [vmem:[#allocation8 + $0x18] sm:$0xff]
    %v1715 = vlaneseq
    %v1716 = vshrl.u32 %v1715, 7
    %v1717 = vsub.s32 0, %v1716
    %v1718 = vrot.slane %v76, %v1717
    %v1720 = vsel %vm78, %v1709, 0
    %v1723 = vsel %vm78, %v1710, 0
    %1725 = vmatprep.subr.mxu0 0.0
    %1726 = vmatpush1.msra.mxu0 %v1711
    %1727 = vmatprep.subr.mxu0 0.0
    %1728 = vmatpush1.msra.mxu0 %v1712
    %1729 = vmatprep.subr.mxu0 0.0
    %1730 = vmatpush1.msra.mxu0 %v1713
    %1731 = vmatprep.subr.mxu0 0.0
    %1732 = vmatpush1.msra.mxu0 %v1714
    %1733 = vmatprep.subr.mxu0 0.0
    %1734 = vmatpush1.msra.mxu0 0.0
    %1735 = vmatprep.subr.mxu0 0.0
    %1736 = vmatpush1.msra.mxu0 0.0
    %1737 = vmatprep.subr.mxu0 0.0
    %1738 = vmatpush1.msra.mxu0 0.0
    %1739 = vmatprep.subr.mxu0 0.0
    %1740 = vmatpush1.msra.mxu0 0.0
    %1741 = vmatprep.subr.mxu0 0.0
    %1742 = vmatpush1.msra.mxu0 0.0
    %1743 = vmatprep.subr.mxu0 0.0
    %1744 = vmatpush1.msra.mxu0 0.0
    %1745 = vmatprep.subr.mxu0 0.0
    %1746 = vmatpush1.msra.mxu0 0.0
    %1747 = vmatprep.subr.mxu0 0.0
    %1748 = vmatpush1.msra.mxu0 0.0
    %1749 = vmatprep.subr.mxu0 0.0
    %1750 = vmatpush1.msra.mxu0 0.0
    %1751 = vmatprep.subr.mxu0 0.0
    %1752 = vmatpush1.msra.mxu0 0.0
    %1753 = vmatprep.subr.mxu0 0.0
    %1754 = vmatpush1.msra.mxu0 0.0
    %1755 = vmatprep.subr.mxu0 0.0
    %1756 = vmatpush1.msra.mxu0 0.0
    %1757 = vmatprep.subr.mxu0 0.0
    %1758 = vmatpush1.msra.mxu0 0.0
    %1759 = vmatprep.subr.mxu0 0.0
    %1760 = vmatpush1.msra.mxu0 0.0
    %1761 = vmatprep.subr.mxu0 0.0
    %1762 = vmatpush1.msra.mxu0 0.0
    %1763 = vmatprep.subr.mxu0 0.0
    %1764 = vmatpush1.msra.mxu0 0.0
    %1765 = vmatprep.subr.mxu0 0.0
    %1766 = vmatpush1.msra.mxu0 0.0
    %1767 = vmatprep.subr.mxu0 0.0
    %1768 = vmatpush1.msra.mxu0 0.0
    %1769 = vmatprep.subr.mxu0 0.0
    %1770 = vmatpush1.msra.mxu0 0.0
    %1771 = vmatprep.subr.mxu0 0.0
    %1772 = vmatpush1.msra.mxu0 0.0
    %1773 = vmatprep.subr.mxu0 0.0
    %1774 = vmatpush1.msra.mxu0 0.0
    %1775 = vmatprep.subr.mxu0 0.0
    %1776 = vmatpush1.msra.mxu0 0.0
    %1777 = vmatprep.subr.mxu0 0.0
    %1778 = vmatpush1.msra.mxu0 0.0
    %1779 = vmatprep.subr.mxu0 0.0
    %1780 = vmatpush1.msra.mxu0 0.0
    %1781 = vmatprep.subr.mxu0 0.0
    %1782 = vmatpush1.msra.mxu0 0.0
    %1783 = vmatprep.subr.mxu0 0.0
    %1784 = vmatpush1.msra.mxu0 0.0
    %1785 = vmatprep.subr.mxu0 0.0
    %1786 = vmatpush1.msra.mxu0 0.0
    %1787 = vmatprep.subr.mxu0 0.0
    %1788 = vmatpush1.msra.mxu0 0.0
    %1789 = vmatprep.mubr.f32.mxu0 0.0
    %1790 = vmatmul.mubr.f32.gmra.mrb[0].mxu0 %v1720
    %v1791 = vpop.f32.mrb[0].mxu0
    %v1792 = vadd.f32 %v1718, %v1791
    %v1793 = vpop.f32.mrb[0].mxu0
    %1794 = vmatprep.mubr.f32.mxu0 0.0
    %1795 = vmatmul.mubr.f32.gmra.mrb[0].mxu0 %v1723
    %v1796 = vpop.f32.mrb[0].mxu0
    %v1797 = vadd.f32 %v1718, %v1796
    %v1798 = vpop.f32.mrb[0].mxu0
    %1799 = vdwg.mxu0
    %v1800 = vmul.f32 %v1792, 0.5
    %v1801 = vmul.f32 %v1797, 0.5
    %v1802 = vmul.f32 %v1792, 0.70710677
    %v1803 = vmul.f32 %v1797, 0.70710677
    %vm1804 = vcmp.ge.f32.partialorder %v1802, 0.0
    %vm1805 = vcmp.ge.f32.partialorder %v1803, 0.0
    %v1806 = vsel %vm1804, 1.0, -1.0
    %v1807 = vsel %vm1805, 1.0, -1.0
    %v1808 = vand.u32 2147483647, %v1802
    %v1809 = vand.u32 2147483647, %v1803
    %v1810 = vmul.f32 %v1808, 0.3275911
    %v1811 = vmul.f32 %v1809, 0.3275911
    %v1812 = vadd.f32 %v1810, 1.0
    %v1813 = vadd.f32 %v1811, 1.0
    %v1814 = vrcp.pop %v1812
    %v1815 = vmul.f32 1.0, %v1814
    %v1816 = vrcp.pop %v1813
    %v1817 = vmul.f32 1.0, %v1816
    %v1818 = vmul.f32 %v1815, 1.0614054
    %v1819 = vmul.f32 %v1817, 1.0614054
    %v1820 = vadd.f32 %v1818, -1.4531521
    %v1821 = vadd.f32 %v1819, -1.4531521
    %v1822 = vmul.f32 %v1820, %v1815
    %v1823 = vmul.f32 %v1821, %v1817
    %v1824 = vadd.f32 %v1822, 1.4214138
    %v1825 = vadd.f32 %v1823, 1.4214138
    %v1826 = vmul.f32 %v1824, %v1815
    %v1827 = vmul.f32 %v1825, %v1817
    %v1828 = vadd.f32 %v1826, -0.28449672
    %v1829 = vadd.f32 %v1827, -0.28449672
    %v1830 = vmul.f32 %v1828, %v1815
    %v1831 = vmul.f32 %v1829, %v1817
    %v1832 = vadd.f32 %v1830, 0.2548296
    %v1833 = vadd.f32 %v1831, 0.2548296
    %v1834 = vmul.f32 %v1832, %v1815
    %v1835 = vmul.f32 %v1833, %v1817
    %v1836 = vsub.f32 0.0, %v1808
    %v1837 = vsub.f32 0.0, %v1809
    %v1838 = vmul.f32 %v1836, %v1808
    %v1839 = vmul.f32 %v1837, %v1809
    %v1840 = vmul.f32 %v1838, 1.442695
    %v1841 = vpow.pop %v1840
    %v1842 = vmul.f32 %v1839, 1.442695
    %v1843 = vpow.pop %v1842
    %v1844 = vmul.f32 %v1834, %v1841
    %v1845 = vmul.f32 %v1835, %v1843
    %v1846 = vsub.f32 1.0, %v1844
    %v1847 = vsub.f32 1.0, %v1845
    %v1848 = vmul.f32 %v1806, %v1846
    %v1849 = vmul.f32 %v1807, %v1847
    %v1850 = vadd.f32 %v1848, 1.0
    %v1851 = vadd.f32 %v1849, 1.0
    %v1852 = vmul.f32 %v1800, %v1850
    %v1853 = vmul.f32 %v1801, %v1851
    %v1854 = vld [vmem:[%s5] sm:$0xff]
    %v1855 = vld [vmem:[%s5 + $0x8] sm:$0xff]
    %v1856 = vld [vmem:[%s5 + $0x10] sm:$0xff]
    %v1857 = vld [vmem:[%s5 + $0x18] sm:$0xff]
    %v1858 = vld [vmem:[%s5 + $0x20] sm:$0xff]
    %v1859 = vld [vmem:[%s5 + $0x28] sm:$0xff]
    %v1860 = vld [vmem:[%s5 + $0x30] sm:$0xff]
    %v1861 = vld [vmem:[%s5 + $0x38] sm:$0xff]
    %v1862 = vlaneseq
    %v1863 = vshrl.u32 %v1862, 7
    %v1864 = vsub.s32 0, %v1863
    %v1865 = vrot.slane %v77, %v1864
    %vm1866 = vcmask 523264
    %v1868 = vsel %vm1866, %v1852, 0
    %v1871 = vsel %vm1866, %v1853, 0
    %1873 = vmatprep.subr.mxu0 0.0
    %1874 = vmatpush1.msra.mxu0 %v1854
    %1875 = vmatprep.subr.mxu0 0.0
    %1876 = vmatpush1.msra.mxu0 %v1855
    %1877 = vmatprep.subr.mxu0 0.0
    %1878 = vmatpush1.msra.mxu0 %v1856
    %1879 = vmatprep.subr.mxu0 0.0
    %1880 = vmatpush1.msra.mxu0 %v1857
    %1881 = vmatprep.subr.mxu0 0.0
    %1882 = vmatpush1.msra.mxu0 %v1858
    %1883 = vmatprep.subr.mxu0 0.0
    %1884 = vmatpush1.msra.mxu0 %v1859
    %1885 = vmatprep.subr.mxu0 0.0
    %1886 = vmatpush1.msra.mxu0 %v1860
    %1887 = vmatprep.subr.mxu0 0.0
    %1888 = vmatpush1.msra.mxu0 %v1861
    %1889 = vmatprep.subr.mxu0 0.0
    %1890 = vmatpush1.msra.mxu0 0.0
    %1891 = vmatprep.subr.mxu0 0.0
    %1892 = vmatpush1.msra.mxu0 0.0
    %1893 = vmatprep.subr.mxu0 0.0
    %1894 = vmatpush1.msra.mxu0 0.0
    %1895 = vmatprep.subr.mxu0 0.0
    %1896 = vmatpush1.msra.mxu0 0.0
    %1897 = vmatprep.subr.mxu0 0.0
    %1898 = vmatpush1.msra.mxu0 0.0
    %1899 = vmatprep.subr.mxu0 0.0
    %1900 = vmatpush1.msra.mxu0 0.0
    %1901 = vmatprep.subr.mxu0 0.0
    %1902 = vmatpush1.msra.mxu0 0.0
    %1903 = vmatprep.subr.mxu0 0.0
    %1904 = vmatpush1.msra.mxu0 0.0
    %1905 = vmatprep.subr.mxu0 0.0
    %1906 = vmatpush1.msra.mxu0 0.0
    %1907 = vmatprep.subr.mxu0 0.0
    %1908 = vmatpush1.msra.mxu0 0.0
    %1909 = vmatprep.subr.mxu0 0.0
    %1910 = vmatpush1.msra.mxu0 0.0
    %1911 = vmatprep.subr.mxu0 0.0
    %1912 = vmatpush1.msra.mxu0 0.0
    %1913 = vmatprep.subr.mxu0 0.0
    %1914 = vmatpush1.msra.mxu0 0.0
    %1915 = vmatprep.subr.mxu0 0.0
    %1916 = vmatpush1.msra.mxu0 0.0
    %1917 = vmatprep.subr.mxu0 0.0
    %1918 = vmatpush1.msra.mxu0 0.0
    %1919 = vmatprep.subr.mxu0 0.0
    %1920 = vmatpush1.msra.mxu0 0.0
    %1921 = vmatprep.subr.mxu0 0.0
    %1922 = vmatpush1.msra.mxu0 0.0
    %1923 = vmatprep.subr.mxu0 0.0
    %1924 = vmatpush1.msra.mxu0 0.0
    %1925 = vmatprep.subr.mxu0 0.0
    %1926 = vmatpush1.msra.mxu0 0.0
    %1927 = vmatprep.subr.mxu0 0.0
    %1928 = vmatpush1.msra.mxu0 0.0
    %1929 = vmatprep.subr.mxu0 0.0
    %1930 = vmatpush1.msra.mxu0 0.0
    %1931 = vmatprep.subr.mxu0 0.0
    %1932 = vmatpush1.msra.mxu0 0.0
    %1933 = vmatprep.subr.mxu0 0.0
    %1934 = vmatpush1.msra.mxu0 0.0
    %1935 = vmatprep.subr.mxu0 0.0
    %1936 = vmatpush1.msra.mxu0 0.0
    %1937 = vmatprep.mubr.f32.mxu0 0.0
    %1938 = vmatmul.mubr.f32.gmra.mrb[0].mxu0 %v1868
    %v1939 = vpop.f32.mrb[0].mxu0
    %v1940 = vadd.f32 %v1865, %v1939
    %v1941 = vpop.f32.mrb[0].mxu0
    %1942 = vmatprep.mubr.f32.mxu0 0.0
    %1943 = vmatmul.mubr.f32.gmra.mrb[0].mxu0 %v1871
    %v1944 = vpop.f32.mrb[0].mxu0
    %v1945 = vadd.f32 %v1865, %v1944
    %v1946 = vpop.f32.mrb[0].mxu0
    %1947 = vdwg.mxu0
    %v1948 = vadd.f32 %v1671, %v1940
    %v1949 = vadd.f32 %v1672, %v1945
    %1950 = vst.msk [vmem:[#allocation9] sm:$0xff] %vm78, %v1948
    %1951 = vst.msk [vmem:[#allocation9 + $0x8] sm:$0xff] %vm78, %v1949
    // Predicated region
    $region42: #{tpu_custom_call.1} parent=1 // pred_check
      _
    $region43: #{tpu_custom_call.1} parent=1 // pred_check_branch
      %1953 = sbr.rel (0) target = $region45
    $region44: #{tpu_custom_call.1} parent=1 // pred_region
      %s1955 = ssub.s32 256, 256
      %1956 = vsyncadd [#allocation5], %s1955
      %s1957 = sshll.u32 [#allocation9], 4
      %s1958 = int_to_ptr.vmem [resolvable:$true] %s1957
      %1963 = dma.vmem_to_hbm [thread:$0]  %s1958, 256, %s7, [#allocation5], 128, 128, 8
    $region45: #{tpu_custom_call.1} parent=1 // pred_fallthru
      _
    // Predicated region
    $region46: #{tpu_custom_call.1} parent=1 // pred_check
      _
    $region47: #{tpu_custom_call.1} parent=1 // pred_check_branch
      %1965 = sbr.rel (0) target = $region49
    $region48: #{tpu_custom_call.1} parent=1 // pred_region
      %1966 = dma.done [#allocation5], 256
    $region49: #{tpu_custom_call.1} parent=1 // pred_fallthru
      _
    %1967 = vsyncpa [#allocation4], 1
    %1968 = vsyncpa [#allocation7], 1
    %1969 = vsyncpa [#allocation5], 1

</llo_original>
